<compile_context>
chip_gen: v7x
topology: tpu7x:2x2x1
jax: 0.10.0
libtpu: 0.0.40
codegen_flags: <defaults>
</compile_context>

<pallas_src>
import jax
import jax.numpy as jnp
from jax.experimental import pallas as pl
from jax.experimental.pallas import tpu as pltpu


_VMEM_BUDGET_BYTES = 24 * 1024 * 1024   # double-buffered in+out blocks; fits v7x headroom
_MIN_GRID_STEPS = 4                     # >= 2 steps per v7x TensorCore when possible


def _round_up(x, m):
    return (x + m - 1) // m * m


def _choose_rows_per_step(B, nH, nW, C, ph, W, D, itemsize,
                          vmem_budget_bytes=_VMEM_BUDGET_BYTES,
                          min_grid_steps=_MIN_GRID_STEPS):
    """Pick R = patch-rows processed per grid step.

    Constraints:
      * R divides nH (no partial blocks).
      * Output-block sublane count R*nW is a multiple of the min sublane tile,
        or R == nH (block == full dim) -> always-legal, unmasked writeback.
    Preference:
      * Largest R whose double-buffered input+output blocks fit the VMEM budget.
      * Keep at least `min_grid_steps` grid steps so megacore/pipelining have work.
    Returns (R, estimated pipeline VMEM bytes).
    """
    sublane = max(8, 32 // itemsize)        # 8 (f32) / 16 (bf16) / 32 (int8)
    lane = 128

    def pipeline_bytes(r):
        in_b = C * r * _round_up(ph, sublane) * _round_up(W, lane) * itemsize
        out_b = _round_up(r * nW, sublane) * _round_up(D, lane) * itemsize
        return 2 * (in_b + out_b)           # 2 pipeline buffers for each

    legal = [r for r in range(1, nH + 1)
             if nH % r == 0 and ((r * nW) % sublane == 0 or r == nH)]
    fits = [r for r in legal if pipeline_bytes(r) <= vmem_budget_bytes]
    if not fits:
        r = min(legal)                      # smallest legal block; vmem limit is raised below
        return r, pipeline_bytes(r)
    enough = [r for r in fits if B * (nH // r) >= min_grid_steps]
    pool = enough if enough else fits
    r = max(pool)
    return r, pipeline_bytes(r)


def _make_patchify_kernel(C, R, ph, nW, pw):
    K = C * ph
    D = K * pw

    def kernel(x_ref, o_ref):
        # x_ref: (1, C, R, ph, W)  lane-dense (W minor)  -- R patch-rows, all channels
        # o_ref: (1, R*nW, D)      lane-dense (D minor)  -- the R*nW sequence rows
        #
        # Per patch-row r, relayout (C, ph, W) -> (nW, D) with
        #   out[j, c*ph*pw + kh*pw + kw] = in[c, kh, j*pw + kw]
        # using only lane split/merge reshapes and last-two-dims (XLU) transposes,
        # finishing with a single full-width (nW, D) store.  R is VMEM-budgeted and
        # small, so a static unroll keeps code size bounded and the live set to
        # roughly one (nW, D) tile per iteration.
        for r in range(R):
            slab = x_ref[0, :, r, :, :]            # (C, ph, W)
            y = slab.reshape(K, nW, pw)            # split W (lanes) -> (patch col j, kw)
            y = jnp.swapaxes(y, 1, 2)              # (K, pw, nW)  batched minor-dims transpose
            y = y.reshape(D, nW)                   # merge (K, pw) -> D; lane dim unchanged
            o_ref[0, r * nW:(r + 1) * nW, :] = y.T  # (nW, D): 2-D XLU transpose + one wide store

    return kernel


def image2seq(x, patch_size):
    """Pallas equivalent of Image2Seq.forward for NCHW input `x`."""
    if isinstance(patch_size, int):
        patch_size = (patch_size, patch_size)
    ph, pw = patch_size
    B, C, H, W = x.shape
    assert H % ph == 0 and W % pw == 0, "image size must be divisible by patch size"
    nH, nW = H // ph, W // pw
    D = C * ph * pw
    itemsize = jnp.dtype(x.dtype).itemsize

    R, pipe_bytes = _choose_rows_per_step(B, nH, nW, C, ph, W, D, itemsize)

    # (B, C, H, W) -> (B, C, nH, ph, W): contiguous, metadata-only.  Keeps W as the
    # minor (lane) dim so each HBM->VMEM DMA is C*R contiguous runs of ph*W elements.
    x5 = x.reshape(B, C, nH, ph, W)

    total_bytes = B * C * H * W * itemsize
    vmem_limit = min(max(32 * 1024 * 1024, pipe_bytes + (4 << 20)), 112 * 1024 * 1024)

    kernel = _make_patchify_kernel(C, R, ph, nW, pw)
    return pl.pallas_call(
        kernel,
        out_shape=jax.ShapeDtypeStruct((B, nH * nW, D), x.dtype),
        grid=(B, nH // R),
        in_specs=[
            # R patch-rows of one image, all channels; last two block dims (ph, W)
            # equal the full array dims -> always legal, contiguous DMA.
            pl.BlockSpec((1, C, R, ph, W), lambda b, i: (b, 0, i, 0, 0)),
        ],
        # R*nW sequence rows of width D, written straight into the (B, L, D) output.
        out_specs=pl.BlockSpec((1, R * nW, D), lambda b, i: (b, i, 0)),
        compiler_params=pltpu.CompilerParams(
            dimension_semantics=("parallel", "parallel"),
            vmem_limit_bytes=vmem_limit,
        ),
        # Pure data movement: read + write the whole tensor once.
        cost_estimate=pl.CostEstimate(
            flops=0, transcendentals=0, bytes_accessed=2 * total_bytes
        ),
    )(x5)


def _reference_image2seq(x, patch_size):
    # Pure-JAX reference of F.unfold(x, k=patch, stride=patch).swapaxes(1, 2)
    ph, pw = patch_size
    B, C, H, W = x.shape
    nH, nW = H // ph, W // pw
    y = x.reshape(B, C, nH, ph, nW, pw)
    y = jnp.transpose(y, (0, 2, 4, 1, 3, 5))      # (B, nH, nW, C, ph, pw)
    return y.reshape(B, nH * nW, C * ph * pw)


if __name__ == "__main__":
    key = jax.random.PRNGKey(0)

    # Module config: channels=4, image_size=16, patch_size=4  ->  L=16, D=64
    B, C, H, W = 2, 4, 16, 16
    patch = (4, 4)
    x = jax.random.normal(key, (B, C, H, W), dtype=jnp.float32)

    out = image2seq(x, patch)
    out = jax.block_until_ready(out)
    ref = _reference_image2seq(x, patch)
    assert out.shape == (B, (H // patch[0]) * (W // patch[1]), C * patch[0] * patch[1])
    assert jnp.allclose(out, ref), "Pallas Image2Seq mismatch vs reference (config 1)"

    # Second config exercising R < nH (multi patch-row blocks) and non-pow2 C.
    B2, C2, H2, W2 = 2, 3, 32, 32
    patch2 = (4, 4)
    x2 = jax.random.normal(jax.random.PRNGKey(0), (B2, C2, H2, W2), dtype=jnp.float32)
    out2 = jax.block_until_ready(image2seq(x2, patch2))
    ref2 = _reference_image2seq(x2, patch2)
    assert jnp.allclose(out2, ref2), "Pallas Image2Seq mismatch vs reference (config 2)"

    print("KERNEL_OK")
</pallas_src>

<mosaic_0001>
module attributes {stable_mosaic.version = 11 : i64} {
  func.func @kernel(%arg0: i32, %arg1: i32, %arg2: memref<1x4x2x4x16xf32, #tpu.memory_space<vmem>>, %arg3: memref<1x8x64xf32, #tpu.memory_space<vmem>>) attributes {dimension_semantics = [#tpu.dimension_semantics<parallel>, #tpu.dimension_semantics<parallel>], iteration_bounds = array<i64: 2, 2>, scalar_prefetch = 0 : i64, scratch_operands = 0 : i64, tpu.core_type = #tpu.core_type<tc>, window_params = [{transform_indices = @transform_0, window_bounds = array<i64: 1, 4, 2, 4, 16>}, {transform_indices = @transform_1, window_bounds = array<i64: 1, 8, 64>}]} {
    %c0 = arith.constant 0 : index
    %c0_0 = arith.constant 0 : index
    %c0_1 = arith.constant 0 : index
    %c0_2 = arith.constant 0 : index
    %c0_3 = arith.constant 0 : index
    %0 = vector.load %arg2[%c0, %c0_0, %c0_1, %c0_2, %c0_3] : memref<1x4x2x4x16xf32, #tpu.memory_space<vmem>>, vector<1x4x1x4x16xf32>
    %1 = vector.shape_cast %0 : vector<1x4x1x4x16xf32> to vector<4x4x16xf32>
    %2 = vector.shape_cast %1 : vector<4x4x16xf32> to vector<16x4x4xf32>
    %3 = tpu.transpose %2, [0, 2, 1] : vector<16x4x4xf32> -> vector<16x4x4xf32>
    %4 = vector.shape_cast %3 : vector<16x4x4xf32> to vector<64x4xf32>
    %5 = tpu.transpose %4, [1, 0] : vector<64x4xf32> -> vector<4x64xf32>
    %c0_4 = arith.constant 0 : index
    %c0_5 = arith.constant 0 : index
    %c0_6 = arith.constant 0 : index
    %6 = vector.load %arg3[%c0_4, %c0_5, %c0_6] : memref<1x8x64xf32, #tpu.memory_space<vmem>>, vector<1x4x64xf32>
    %7 = vector.shape_cast %6 : vector<1x4x64xf32> to vector<4x64xf32>
    %8 = vector.shape_cast %5 : vector<4x64xf32> to vector<1x4x64xf32>
    tpu.vector_store %arg3[%c0_4, %c0_5, %c0_6], %8 {strides = array<i32>} : memref<1x8x64xf32, #tpu.memory_space<vmem>>, vector<1x4x64xf32>,
    %c0_7 = arith.constant 0 : index
    %c0_8 = arith.constant 0 : index
    %c1 = arith.constant 1 : index
    %c0_9 = arith.constant 0 : index
    %c0_10 = arith.constant 0 : index
    %9 = vector.load %arg2[%c0_7, %c0_8, %c1, %c0_9, %c0_10] : memref<1x4x2x4x16xf32, #tpu.memory_space<vmem>>, vector<1x4x1x4x16xf32>
    %10 = vector.shape_cast %9 : vector<1x4x1x4x16xf32> to vector<4x4x16xf32>
    %11 = vector.shape_cast %10 : vector<4x4x16xf32> to vector<16x4x4xf32>
    %12 = tpu.transpose %11, [0, 2, 1] : vector<16x4x4xf32> -> vector<16x4x4xf32>
    %13 = vector.shape_cast %12 : vector<16x4x4xf32> to vector<64x4xf32>
    %14 = tpu.transpose %13, [1, 0] : vector<64x4xf32> -> vector<4x64xf32>
    %c0_11 = arith.constant 0 : index
    %c4 = arith.constant 4 : index
    %c0_12 = arith.constant 0 : index
    %15 = vector.load %arg3[%c0_11, %c4, %c0_12] : memref<1x8x64xf32, #tpu.memory_space<vmem>>, vector<1x4x64xf32>
    %16 = vector.shape_cast %15 : vector<1x4x64xf32> to vector<4x64xf32>
    %17 = vector.shape_cast %14 : vector<4x64xf32> to vector<1x4x64xf32>
    tpu.vector_store %arg3[%c0_11, %c4, %c0_12], %17 {strides = array<i32>} : memref<1x8x64xf32, #tpu.memory_space<vmem>>, vector<1x4x64xf32>,
    return
  }
  func.func @transform_0(%arg0: i32, %arg1: i32) -> (i32, i32, i32, i32, i32) {
    %c0_i32 = arith.constant 0 : i32
    %c0_i32_0 = arith.constant 0 : i32
    %c0_i32_1 = arith.constant 0 : i32
    %c0_i32_2 = arith.constant 0 : i32
    return %arg0, %c0_i32, %arg1, %c0_i32_0, %c0_i32_1 : i32, i32, i32, i32, i32
  }
  func.func @transform_1(%arg0: i32, %arg1: i32) -> (i32, i32, i32) {
    %c0_i32 = arith.constant 0 : i32
    %c0_i32_0 = arith.constant 0 : i32
    return %arg0, %arg1, %c0_i32 : i32, i32, i32
  }
}

</mosaic_0001>

<llo_original>
// kernel: tpu_custom_call.1
$region0: #{tpu_custom_call.1}
  #allocation0 [shape = 'u32[]', space=smem, size = 0x4, offset = 0x4, fixed_abs, tag = 'smem constant byte address 0x4 - core index']
  #allocation1 [shape = 'u32[144,128]{1,0:T(1,128)}', space=vmem, size = 0x12000, scoped, tag = 'internal scratch']
  #allocation6 [shape = 's32[]', space=sflag, size = 0x4, offset = 0, fixed_abs, tag = 'sflag constant byte address 0x0 - dummy sync flag']
  %s0 = inlined_call_operand.hbm [shape: f32[2,4,4,4,16], index: 0, kind: input, shape index: {}]
  %s1 = inlined_call_operand.hbm [shape: f32[2,16,64], index: 1, kind: output, shape index: {}]
  %s2 = sld [smem:[#allocation0]]
  $region41: #{tpu_custom_call.1} parent=0
    _
  %s4 = ssub.s32 1, %s2
  %s5 = scalar_select 0, %s4, %s2
  $region1: #{tpu_custom_call.1} parent=0
    #allocation2 [shape = 'u8[32768]{0}', space=vmem, size = 0x8000, scoped, tag = 'input window, operand 0']
    #allocation3 [shape = 's32[2]{0}', space=sflag, size = 0x8, scoped, tag = 'scoped memory for tpu_custom_call.1']
    #allocation4 [shape = 's32[2]{0}', space=sflag, size = 0x8, scoped, tag = 'scoped memory for tpu_custom_call.1']
    #allocation5 [shape = 'u8[8192]{0}', space=vmem, size = 0x2000, scoped, tag = 'output window, operand 0']
    %6 = vsyncpa [#allocation3], 0
    %s7 = scalar_lea.sflag [#allocation3], 1
    %8 = vsyncpa %s7, 0
    %9 = vsyncpa [#allocation4], 0
    %s10 = scalar_lea.sflag [#allocation4], 1
    %11 = vsyncpa %s10, 0
    loop: start=0, step=1, limit=6
    $region2: #{tpu_custom_call.1} parent=1 // loop_pre_header
      _
    $region3: #{tpu_custom_call.1} parent=1 // loop_header
      %s13 = sphi 0, %s17
      %p14 = scmp.ge.s32.totalorder %s13, 6
      %s20 = sphi 0, %s32
      %s21 = sphi 0, %s28
      %s22 = sphi 0, %s20
      %s23 = sphi 0, %s21
      %s24 = sphi 0, %s22
      %s25 = sphi 0, %s23
      %s37 = sphi 0, %s39
      %s40 = sphi 0, %s37
      %s41 = sphi 0, %s40
      %s57 = sphi 0, %s41
      %s65 = sphi 0, %s67
      %s68 = sphi 0, %s65
      %s69 = sphi 0, %s68
      %s85 = sphi 0, %s69
    $region4: #{tpu_custom_call.1} parent=1 // loop_header_branch
      %16 = sbr.rel (%p14) target = $region8
    $region5: #{tpu_custom_call.1} parent=1 // loop_body
      %s18 = ssub.s32 %s13, 1
      %s19 = ssub.s32 %s13, 2
      %s26 = sadd.s32 1, %s21
      %p27 = scmp.ge.s32.totalorder %s26, 2
      %s28 = scalar_select %p27, 0, %s26
      %s29 = sadd.s32 1, %s20
      %s30 = scalar_select %p27, %s29, %s20
      %p31 = scmp.ge.s32.totalorder %s30, 2
      %s32 = scalar_select %p31, 0, %s30
      %s33 = ssub.s32 %s20, %s32
      %s34 = ssub.s32 %s21, %s28
      %s35 = sor.u32 %s33, %s34
      %p36 = scmp.eq.s32.totalorder %s35, 0
      %s38 = sadd.s32 %s37, 1
      %s39 = scalar_select %p36, %s37, %s38
      %p42 = pneg %p36
      %p43 = scmp.eq.s32.totalorder %s13, 3
      %p44 = por %p42, %p43
      %p45 = scmp.ne.s32.totalorder %s37, %s40
      %p46 = scmp.eq.s32.totalorder %s13, 0
      %p47 = por %p45, %p46
      %p48 = scmp.ne.s32.totalorder %s37, %s40
      %p49 = scmp.eq.s32.totalorder %s18, 3
      %p50 = por %p48, %p49
      %p51 = scmp.ne.s32.totalorder %s40, %s41
      %p52 = scmp.eq.s32.totalorder %s18, 0
      %p53 = por %p51, %p52
      %p54 = scmp.ne.s32.totalorder %s40, %s41
      %p55 = scmp.eq.s32.totalorder %s19, 3
      %p56 = por %p54, %p55
      %p58 = scmp.ne.s32.totalorder %s41, %s57
      %p59 = scmp.eq.s32.totalorder %s19, 0
      %p60 = por %p58, %p59
      %s61 = ssub.s32 %s20, %s32
      %s62 = ssub.s32 %s21, %s28
      %s63 = sor.u32 %s61, %s62
      %p64 = scmp.eq.s32.totalorder %s63, 0
      %s66 = sadd.s32 %s65, 1
      %s67 = scalar_select %p64, %s65, %s66
      %p70 = pneg %p64
      %p71 = scmp.eq.s32.totalorder %s13, 3
      %p72 = por %p70, %p71
      %p73 = scmp.ne.s32.totalorder %s65, %s68
      %p74 = scmp.eq.s32.totalorder %s13, 0
      %p75 = por %p73, %p74
      %p76 = scmp.ne.s32.totalorder %s65, %s68
      %p77 = scmp.eq.s32.totalorder %s18, 3
      %p78 = por %p76, %p77
      %p79 = scmp.ne.s32.totalorder %s68, %s69
      %p80 = scmp.eq.s32.totalorder %s18, 0
      %p81 = por %p79, %p80
      %p82 = scmp.ne.s32.totalorder %s68, %s69
      %p83 = scmp.eq.s32.totalorder %s19, 3
      %p84 = por %p82, %p83
      %p86 = scmp.ne.s32.totalorder %s69, %s85
      %p87 = scmp.eq.s32.totalorder %s19, 0
      %p88 = por %p86, %p87
      %p89 = scmp.le.s32.totalorder 1, %s13
      %p90 = scmp.lt.s32.totalorder %s13, 5
      %p91 = pnand %p89, %p90
      %p92 = pneg %p91
      // Predicated region
      $region9: #{tpu_custom_call.1} parent=5 // pred_check
        _
      $region10: #{tpu_custom_call.1} parent=5 // pred_check_branch
        %94 = sbr.rel (%p91) target = $region12
      $region11: #{tpu_custom_call.1} parent=5 // pred_region
        %s95 = ssub.s32 %s13, 1
      $region12: #{tpu_custom_call.1} parent=5 // pred_fallthru
        _
      %p96 = scmp.lt.s32.totalorder %s13, 4
      // Predicated region
      $region13: #{tpu_custom_call.1} parent=5 // pred_check
        %p97 = pneg %p96
      $region14: #{tpu_custom_call.1} parent=5 // pred_check_branch
        %99 = sbr.rel (%p97) target = $region16
      $region15: #{tpu_custom_call.1} parent=5 // pred_region
        // Predicated region
        $region17: #{tpu_custom_call.1} parent=15 // pred_check
          %p100 = pneg %p47
        $region18: #{tpu_custom_call.1} parent=15 // pred_check_branch
          %102 = sbr.rel (%p100) target = $region20
        $region19: #{tpu_custom_call.1} parent=15 // pred_region
          #allocation7 [shape = 'u32[6]{0}', space=smem, size = 0x18, scoped, tag = 'DMA stride descriptor']
          %s103 = sand.u32 %s37, 1
          %s104 = scalar_lea.sflag [#allocation3], %s103
          %s105 = sand.u32 %s37, 1
          %s106 = smul.addr %s105, 32
          %s107 = scalar_lea.vmem [#allocation2], %s106
          %s108 = smul.u32 2, %s21
          %s110 = ssub.s32 512, 512
          %111 = vsyncadd %s104, %s110
          %s112 = smul.addr %s20, 16
          %s113 = sadd.s32 %s108, %s112
          %s114 = smul.addr %s113, 64
          %s115 = scalar_lea.hbm %s0, %s114
          %s117 = sshll.u32 1, 14
          %s118 = sxor.u32 4294967295, %s117
          %s120 = sld [smem:[#allocation0]]
          %s121 = sadd.s32 2, %s120
          %s123 = sshll.u32 7, 26
          %s124 = sxor.u32 4294967295, %s123
          %s125 = sand.u32 0, %s124
          %s126 = sshll.u32 %s121, 26
          %s127 = sor.u32 %s125, %s126
          %s128 = sshll.u32 %s107, 4
          %s129 = int_to_ptr.vmem [resolvable:$true] %s128
          %135 = sst [smem:[#allocation7]] 256
          %s136 = scalar_lea.smem [#allocation7], 1
          %137 = sst [smem:[%s136]] 128
          %s138 = scalar_lea.smem [#allocation7], 2
          %139 = sst [smem:[%s138]] 2
          %s140 = scalar_lea.smem [#allocation7], 3
          %141 = sst [smem:[%s140]] 64
          %s142 = scalar_lea.smem [#allocation7], 4
          %143 = sst [smem:[%s142]] 64
          %s144 = scalar_lea.smem [#allocation7], 5
          %145 = sst [smem:[%s144]] 4
          %147 = dma.general %s115, 512, %s129, %s104, [#allocation6], [#allocation7], %s127, 0
        $region20: #{tpu_custom_call.1} parent=15 // pred_fallthru
          _
      $region16: #{tpu_custom_call.1} parent=5 // pred_fallthru
        _
      %p148 = scmp.le.s32.totalorder 1, %s13
      %p149 = scmp.lt.s32.totalorder %s13, 5
      %p150 = pnand %p148, %p149
      %p151 = pneg %p150
      // Predicated region
      $region21: #{tpu_custom_call.1} parent=5 // pred_check
        _
      $region22: #{tpu_custom_call.1} parent=5 // pred_check_branch
        %153 = sbr.rel (%p150) target = $region24
      $region23: #{tpu_custom_call.1} parent=5 // pred_region
        %s154 = ssub.s32 %s13, 1
        %s155 = sand.u32 %s40, 1
        %s156 = scalar_lea.sflag [#allocation3], %s155
        %s157 = sand.u32 %s40, 1
        %s158 = smul.addr %s157, 32
        %s159 = scalar_lea.vmem [#allocation2], %s158
        // Predicated region
        $region25: #{tpu_custom_call.1} parent=23 // pred_check
          %p160 = pneg %p53
        $region26: #{tpu_custom_call.1} parent=23 // pred_check_branch
          %162 = sbr.rel (%p160) target = $region28
        $region27: #{tpu_custom_call.1} parent=23 // pred_region
          %163 = dma.done %s156, 512
        $region28: #{tpu_custom_call.1} parent=23 // pred_fallthru
          _
        %s164 = sand.u32 %s40, 1
        %s165 = scalar_lea.sflag [#allocation3], %s164
        %s166 = sand.u32 %s40, 1
        %s167 = smul.addr %s166, 32
        %s168 = scalar_lea.vmem [#allocation2], %s167
        %p169 = pneg %p53
        %p170 = pneg %p50
        %p171 = pneg %p81
        %p172 = pneg %p78
        %s173 = sand.u32 %s68, 1
        %s174 = scalar_lea.sflag [#allocation4], %s173
        %s175 = sand.u32 %s68, 1
        %s176 = smul.addr %s175, 8
        %s177 = scalar_lea.vmem [#allocation5], %s176
        %s178 = smul.u32 2, %s23
        %v179 = vld [vmem:[%s159] sm:$0xf]
        %v180 = vld [vmem:[%s159 + $0x8] sm:$0xf]
        %v181 = vld [vmem:[%s159 + $0x10] sm:$0xf]
        %v182 = vld [vmem:[%s159 + $0x18] sm:$0xf]
        %187 = vrot.lane.b32.xlu0 %v179, 124
        %v188 = vpop.permute.xlu0 %187
        %189 = vrot.lane.b32.xlu0 %v180, 124
        %v190 = vpop.permute.xlu0 %189
        %191 = vrot.lane.b32.xlu0 %v181, 124
        %v192 = vpop.permute.xlu0 %191
        %193 = vrot.lane.b32.xlu0 %v182, 124
        %v194 = vpop.permute.xlu0 %193
        %199 = vrot.lane.b32.xlu0 %v179, 120
        %v200 = vpop.permute.xlu0 %199
        %201 = vrot.lane.b32.xlu0 %v180, 120
        %v202 = vpop.permute.xlu0 %201
        %203 = vrot.lane.b32.xlu0 %v181, 120
        %v204 = vpop.permute.xlu0 %203
        %205 = vrot.lane.b32.xlu0 %v182, 120
        %v206 = vpop.permute.xlu0 %205
        %211 = vrot.lane.b32.xlu0 %v179, 116
        %v212 = vpop.permute.xlu0 %211
        %213 = vrot.lane.b32.xlu0 %v180, 116
        %v214 = vpop.permute.xlu0 %213
        %215 = vrot.lane.b32.xlu0 %v181, 116
        %v216 = vpop.permute.xlu0 %215
        %217 = vrot.lane.b32.xlu0 %v182, 116
        %v218 = vpop.permute.xlu0 %217
        %v223 = vcombine.low %v179, %v200
        %v225 = vunpack.c.l.s4 1983009808
        %v226 = vunpack.c.0.s8 %v225
        %v227 = vlaneseq
        %v228 = vshrl.u32 %v227, 7
        %v229 = vsub.s32 %v226, %v228
        %v230 = vrot.slane %v223, %v229
        %v231 = vcombine.low %v188, %v212
        %v233 = vunpack.c.l.s4 1983009808
        %v234 = vunpack.c.0.s8 %v233
        %v235 = vlaneseq
        %v236 = vshrl.u32 %v235, 7
        %v237 = vsub.s32 %v234, %v236
        %v238 = vrot.slane %v231, %v237
        %v239 = vcombine.low %v230, %v238
        %v240 = vcombine.high %v230, %v238
        %v242 = vunpack.c.l.s4 1934713408
        %v243 = vunpack.c.0.s8 %v242
        %v244 = vlaneseq
        %v245 = vshrl.u32 %v244, 7
        %v246 = vsub.s32 %v243, %v245
        %v247 = vrot.slane %v239, %v246
        %v249 = vunpack.c.l.s4 1934713408
        %v250 = vunpack.c.0.s8 %v249
        %v251 = vlaneseq
        %v252 = vshrl.u32 %v251, 7
        %v253 = vsub.s32 %v250, %v252
        %v254 = vrot.slane %v240, %v253
        %v255 = vcombine.high %v247, 0.0
        %v256 = vcombine.high %v254, 0.0
        %v257 = vcombine.low %v180, %v202
        %v259 = vunpack.c.l.s4 1983009808
        %v260 = vunpack.c.0.s8 %v259
        %v261 = vlaneseq
        %v262 = vshrl.u32 %v261, 7
        %v263 = vsub.s32 %v260, %v262
        %v264 = vrot.slane %v257, %v263
        %v265 = vcombine.low %v190, %v214
        %v267 = vunpack.c.l.s4 1983009808
        %v268 = vunpack.c.0.s8 %v267
        %v269 = vlaneseq
        %v270 = vshrl.u32 %v269, 7
        %v271 = vsub.s32 %v268, %v270
        %v272 = vrot.slane %v265, %v271
        %v273 = vcombine.low %v264, %v272
        %v274 = vcombine.high %v264, %v272
        %v276 = vunpack.c.l.s4 1934713408
        %v277 = vunpack.c.0.s8 %v276
        %v278 = vlaneseq
        %v279 = vshrl.u32 %v278, 7
        %v280 = vsub.s32 %v277, %v279
        %v281 = vrot.slane %v273, %v280
        %v283 = vunpack.c.l.s4 1934713408
        %v284 = vunpack.c.0.s8 %v283
        %v285 = vlaneseq
        %v286 = vshrl.u32 %v285, 7
        %v287 = vsub.s32 %v284, %v286
        %v288 = vrot.slane %v274, %v287
        %v289 = vcombine.high %v281, 0.0
        %v290 = vcombine.high %v288, 0.0
        %v291 = vcombine.low %v181, %v204
        %v293 = vunpack.c.l.s4 1983009808
        %v294 = vunpack.c.0.s8 %v293
        %v295 = vlaneseq
        %v296 = vshrl.u32 %v295, 7
        %v297 = vsub.s32 %v294, %v296
        %v298 = vrot.slane %v291, %v297
        %v299 = vcombine.low %v192, %v216
        %v301 = vunpack.c.l.s4 1983009808
        %v302 = vunpack.c.0.s8 %v301
        %v303 = vlaneseq
        %v304 = vshrl.u32 %v303, 7
        %v305 = vsub.s32 %v302, %v304
        %v306 = vrot.slane %v299, %v305
        %v307 = vcombine.low %v298, %v306
        %v308 = vcombine.high %v298, %v306
        %v310 = vunpack.c.l.s4 1934713408
        %v311 = vunpack.c.0.s8 %v310
        %v312 = vlaneseq
        %v313 = vshrl.u32 %v312, 7
        %v314 = vsub.s32 %v311, %v313
        %v315 = vrot.slane %v307, %v314
        %v317 = vunpack.c.l.s4 1934713408
        %v318 = vunpack.c.0.s8 %v317
        %v319 = vlaneseq
        %v320 = vshrl.u32 %v319, 7
        %v321 = vsub.s32 %v318, %v320
        %v322 = vrot.slane %v308, %v321
        %v323 = vcombine.high %v315, 0.0
        %v324 = vcombine.high %v322, 0.0
        %v325 = vcombine.low %v182, %v206
        %v327 = vunpack.c.l.s4 1983009808
        %v328 = vunpack.c.0.s8 %v327
        %v329 = vlaneseq
        %v330 = vshrl.u32 %v329, 7
        %v331 = vsub.s32 %v328, %v330
        %v332 = vrot.slane %v325, %v331
        %v333 = vcombine.low %v194, %v218
        %v335 = vunpack.c.l.s4 1983009808
        %v336 = vunpack.c.0.s8 %v335
        %v337 = vlaneseq
        %v338 = vshrl.u32 %v337, 7
        %v339 = vsub.s32 %v336, %v338
        %v340 = vrot.slane %v333, %v339
        %v341 = vcombine.low %v332, %v340
        %v342 = vcombine.high %v332, %v340
        %v344 = vunpack.c.l.s4 1934713408
        %v345 = vunpack.c.0.s8 %v344
        %v346 = vlaneseq
        %v347 = vshrl.u32 %v346, 7
        %v348 = vsub.s32 %v345, %v347
        %v349 = vrot.slane %v341, %v348
        %v351 = vunpack.c.l.s4 1934713408
        %v352 = vunpack.c.0.s8 %v351
        %v353 = vlaneseq
        %v354 = vshrl.u32 %v353, 7
        %v355 = vsub.s32 %v352, %v354
        %v356 = vrot.slane %v342, %v355
        %v357 = vcombine.high %v349, 0.0
        %v358 = vcombine.high %v356, 0.0
        %359 = vxpose.xlu0.b32.start [1/16] %v247, 128
        %360 = vxpose.xlu0.b32.cont [2/16] 0.0, 128
        %361 = vxpose.xlu0.b32.cont [3/16] 0.0, 128
        %362 = vxpose.xlu0.b32.cont [4/16] 0.0, 128
        %363 = vxpose.xlu0.b32.cont [5/16] 0.0, 128
        %364 = vxpose.xlu0.b32.cont [6/16] 0.0, 128
        %365 = vxpose.xlu0.b32.cont [7/16] 0.0, 128
        %366 = vxpose.xlu0.b32.cont [8/16] 0.0, 128
        %367 = vxpose.xlu0.b32.cont [9/16] 0.0, 128
        %368 = vxpose.xlu0.b32.cont [10/16] 0.0, 128
        %369 = vxpose.xlu0.b32.cont [11/16] 0.0, 128
        %370 = vxpose.xlu0.b32.cont [12/16] 0.0, 128
        %371 = vxpose.xlu0.b32.cont [13/16] 0.0, 128
        %372 = vxpose.xlu0.b32.cont [14/16] 0.0, 128
        %373 = vxpose.xlu0.b32.cont [15/16] 0.0, 128
        %374 = vxpose.xlu0.b32.end [16/16] 0.0, 128
        %v375 = vpop.trf.xlu0
        %v376 = vpop.trf.xlu0
        %v377 = vpop.trf.xlu0
        %v378 = vpop.trf.xlu0
        %v379 = vpop.trf.xlu0
        %v380 = vpop.trf.xlu0
        %v381 = vpop.trf.xlu0
        %v382 = vpop.trf.xlu0
        %v383 = vpop.trf.xlu0
        %v384 = vpop.trf.xlu0
        %v385 = vpop.trf.xlu0
        %v386 = vpop.trf.xlu0
        %v387 = vpop.trf.xlu0
        %v388 = vpop.trf.xlu0
        %v389 = vpop.trf.xlu0
        %v390 = vpop.trf.xlu0
        %391 = vxpose.xlu0.b32.start [1/16] %v255, 128
        %392 = vxpose.xlu0.b32.cont [2/16] 0.0, 128
        %393 = vxpose.xlu0.b32.cont [3/16] 0.0, 128
        %394 = vxpose.xlu0.b32.cont [4/16] 0.0, 128
        %395 = vxpose.xlu0.b32.cont [5/16] 0.0, 128
        %396 = vxpose.xlu0.b32.cont [6/16] 0.0, 128
        %397 = vxpose.xlu0.b32.cont [7/16] 0.0, 128
        %398 = vxpose.xlu0.b32.cont [8/16] 0.0, 128
        %399 = vxpose.xlu0.b32.cont [9/16] 0.0, 128
        %400 = vxpose.xlu0.b32.cont [10/16] 0.0, 128
        %401 = vxpose.xlu0.b32.cont [11/16] 0.0, 128
        %402 = vxpose.xlu0.b32.cont [12/16] 0.0, 128
        %403 = vxpose.xlu0.b32.cont [13/16] 0.0, 128
        %404 = vxpose.xlu0.b32.cont [14/16] 0.0, 128
        %405 = vxpose.xlu0.b32.cont [15/16] 0.0, 128
        %406 = vxpose.xlu0.b32.end [16/16] 0.0, 128
        %v407 = vpop.trf.xlu0
        %v408 = vpop.trf.xlu0
        %v409 = vpop.trf.xlu0
        %v410 = vpop.trf.xlu0
        %v411 = vpop.trf.xlu0
        %v412 = vpop.trf.xlu0
        %v413 = vpop.trf.xlu0
        %v414 = vpop.trf.xlu0
        %v415 = vpop.trf.xlu0
        %v416 = vpop.trf.xlu0
        %v417 = vpop.trf.xlu0
        %v418 = vpop.trf.xlu0
        %v419 = vpop.trf.xlu0
        %v420 = vpop.trf.xlu0
        %v421 = vpop.trf.xlu0
        %v422 = vpop.trf.xlu0
        %423 = vxpose.xlu0.b32.start [1/16] %v254, 128
        %424 = vxpose.xlu0.b32.cont [2/16] 0.0, 128
        %425 = vxpose.xlu0.b32.cont [3/16] 0.0, 128
        %426 = vxpose.xlu0.b32.cont [4/16] 0.0, 128
        %427 = vxpose.xlu0.b32.cont [5/16] 0.0, 128
        %428 = vxpose.xlu0.b32.cont [6/16] 0.0, 128
        %429 = vxpose.xlu0.b32.cont [7/16] 0.0, 128
        %430 = vxpose.xlu0.b32.cont [8/16] 0.0, 128
        %431 = vxpose.xlu0.b32.cont [9/16] 0.0, 128
        %432 = vxpose.xlu0.b32.cont [10/16] 0.0, 128
        %433 = vxpose.xlu0.b32.cont [11/16] 0.0, 128
        %434 = vxpose.xlu0.b32.cont [12/16] 0.0, 128
        %435 = vxpose.xlu0.b32.cont [13/16] 0.0, 128
        %436 = vxpose.xlu0.b32.cont [14/16] 0.0, 128
        %437 = vxpose.xlu0.b32.cont [15/16] 0.0, 128
        %438 = vxpose.xlu0.b32.end [16/16] 0.0, 128
        %v439 = vpop.trf.xlu0
        %v440 = vpop.trf.xlu0
        %v441 = vpop.trf.xlu0
        %v442 = vpop.trf.xlu0
        %v443 = vpop.trf.xlu0
        %v444 = vpop.trf.xlu0
        %v445 = vpop.trf.xlu0
        %v446 = vpop.trf.xlu0
        %v447 = vpop.trf.xlu0
        %v448 = vpop.trf.xlu0
        %v449 = vpop.trf.xlu0
        %v450 = vpop.trf.xlu0
        %v451 = vpop.trf.xlu0
        %v452 = vpop.trf.xlu0
        %v453 = vpop.trf.xlu0
        %v454 = vpop.trf.xlu0
        %455 = vxpose.xlu0.b32.start [1/16] %v256, 128
        %456 = vxpose.xlu0.b32.cont [2/16] 0.0, 128
        %457 = vxpose.xlu0.b32.cont [3/16] 0.0, 128
        %458 = vxpose.xlu0.b32.cont [4/16] 0.0, 128
        %459 = vxpose.xlu0.b32.cont [5/16] 0.0, 128
        %460 = vxpose.xlu0.b32.cont [6/16] 0.0, 128
        %461 = vxpose.xlu0.b32.cont [7/16] 0.0, 128
        %462 = vxpose.xlu0.b32.cont [8/16] 0.0, 128
        %463 = vxpose.xlu0.b32.cont [9/16] 0.0, 128
        %464 = vxpose.xlu0.b32.cont [10/16] 0.0, 128
        %465 = vxpose.xlu0.b32.cont [11/16] 0.0, 128
        %466 = vxpose.xlu0.b32.cont [12/16] 0.0, 128
        %467 = vxpose.xlu0.b32.cont [13/16] 0.0, 128
        %468 = vxpose.xlu0.b32.cont [14/16] 0.0, 128
        %469 = vxpose.xlu0.b32.cont [15/16] 0.0, 128
        %470 = vxpose.xlu0.b32.end [16/16] 0.0, 128
        %v471 = vpop.trf.xlu0
        %v472 = vpop.trf.xlu0
        %v473 = vpop.trf.xlu0
        %v474 = vpop.trf.xlu0
        %v475 = vpop.trf.xlu0
        %v476 = vpop.trf.xlu0
        %v477 = vpop.trf.xlu0
        %v478 = vpop.trf.xlu0
        %v479 = vpop.trf.xlu0
        %v480 = vpop.trf.xlu0
        %v481 = vpop.trf.xlu0
        %v482 = vpop.trf.xlu0
        %v483 = vpop.trf.xlu0
        %v484 = vpop.trf.xlu0
        %v485 = vpop.trf.xlu0
        %v486 = vpop.trf.xlu0
        %487 = vxpose.xlu0.b32.start [1/16] %v281, 128
        %488 = vxpose.xlu0.b32.cont [2/16] 0.0, 128
        %489 = vxpose.xlu0.b32.cont [3/16] 0.0, 128
        %490 = vxpose.xlu0.b32.cont [4/16] 0.0, 128
        %491 = vxpose.xlu0.b32.cont [5/16] 0.0, 128
        %492 = vxpose.xlu0.b32.cont [6/16] 0.0, 128
        %493 = vxpose.xlu0.b32.cont [7/16] 0.0, 128
        %494 = vxpose.xlu0.b32.cont [8/16] 0.0, 128
        %495 = vxpose.xlu0.b32.cont [9/16] 0.0, 128
        %496 = vxpose.xlu0.b32.cont [10/16] 0.0, 128
        %497 = vxpose.xlu0.b32.cont [11/16] 0.0, 128
        %498 = vxpose.xlu0.b32.cont [12/16] 0.0, 128
        %499 = vxpose.xlu0.b32.cont [13/16] 0.0, 128
        %500 = vxpose.xlu0.b32.cont [14/16] 0.0, 128
        %501 = vxpose.xlu0.b32.cont [15/16] 0.0, 128
        %502 = vxpose.xlu0.b32.end [16/16] 0.0, 128
        %v503 = vpop.trf.xlu0
        %v504 = vpop.trf.xlu0
        %v505 = vpop.trf.xlu0
        %v506 = vpop.trf.xlu0
        %v507 = vpop.trf.xlu0
        %v508 = vpop.trf.xlu0
        %v509 = vpop.trf.xlu0
        %v510 = vpop.trf.xlu0
        %v511 = vpop.trf.xlu0
        %v512 = vpop.trf.xlu0
        %v513 = vpop.trf.xlu0
        %v514 = vpop.trf.xlu0
        %v515 = vpop.trf.xlu0
        %v516 = vpop.trf.xlu0
        %v517 = vpop.trf.xlu0
        %v518 = vpop.trf.xlu0
        %519 = vxpose.xlu0.b32.start [1/16] %v289, 128
        %520 = vxpose.xlu0.b32.cont [2/16] 0.0, 128
        %521 = vxpose.xlu0.b32.cont [3/16] 0.0, 128
        %522 = vxpose.xlu0.b32.cont [4/16] 0.0, 128
        %523 = vxpose.xlu0.b32.cont [5/16] 0.0, 128
        %524 = vxpose.xlu0.b32.cont [6/16] 0.0, 128
        %525 = vxpose.xlu0.b32.cont [7/16] 0.0, 128
        %526 = vxpose.xlu0.b32.cont [8/16] 0.0, 128
        %527 = vxpose.xlu0.b32.cont [9/16] 0.0, 128
        %528 = vxpose.xlu0.b32.cont [10/16] 0.0, 128
        %529 = vxpose.xlu0.b32.cont [11/16] 0.0, 128
        %530 = vxpose.xlu0.b32.cont [12/16] 0.0, 128
        %531 = vxpose.xlu0.b32.cont [13/16] 0.0, 128
        %532 = vxpose.xlu0.b32.cont [14/16] 0.0, 128
        %533 = vxpose.xlu0.b32.cont [15/16] 0.0, 128
        %534 = vxpose.xlu0.b32.end [16/16] 0.0, 128
        %v535 = vpop.trf.xlu0
        %v536 = vpop.trf.xlu0
        %v537 = vpop.trf.xlu0
        %v538 = vpop.trf.xlu0
        %v539 = vpop.trf.xlu0
        %v540 = vpop.trf.xlu0
        %v541 = vpop.trf.xlu0
        %v542 = vpop.trf.xlu0
        %v543 = vpop.trf.xlu0
        %v544 = vpop.trf.xlu0
        %v545 = vpop.trf.xlu0
        %v546 = vpop.trf.xlu0
        %v547 = vpop.trf.xlu0
        %v548 = vpop.trf.xlu0
        %v549 = vpop.trf.xlu0
        %v550 = vpop.trf.xlu0
        %551 = vxpose.xlu0.b32.start [1/16] %v288, 128
        %552 = vxpose.xlu0.b32.cont [2/16] 0.0, 128
        %553 = vxpose.xlu0.b32.cont [3/16] 0.0, 128
        %554 = vxpose.xlu0.b32.cont [4/16] 0.0, 128
        %555 = vxpose.xlu0.b32.cont [5/16] 0.0, 128
        %556 = vxpose.xlu0.b32.cont [6/16] 0.0, 128
        %557 = vxpose.xlu0.b32.cont [7/16] 0.0, 128
        %558 = vxpose.xlu0.b32.cont [8/16] 0.0, 128
        %559 = vxpose.xlu0.b32.cont [9/16] 0.0, 128
        %560 = vxpose.xlu0.b32.cont [10/16] 0.0, 128
        %561 = vxpose.xlu0.b32.cont [11/16] 0.0, 128
        %562 = vxpose.xlu0.b32.cont [12/16] 0.0, 128
        %563 = vxpose.xlu0.b32.cont [13/16] 0.0, 128
        %564 = vxpose.xlu0.b32.cont [14/16] 0.0, 128
        %565 = vxpose.xlu0.b32.cont [15/16] 0.0, 128
        %566 = vxpose.xlu0.b32.end [16/16] 0.0, 128
        %v567 = vpop.trf.xlu0
        %v568 = vpop.trf.xlu0
        %v569 = vpop.trf.xlu0
        %v570 = vpop.trf.xlu0
        %v571 = vpop.trf.xlu0
        %v572 = vpop.trf.xlu0
        %v573 = vpop.trf.xlu0
        %v574 = vpop.trf.xlu0
        %v575 = vpop.trf.xlu0
        %v576 = vpop.trf.xlu0
        %v577 = vpop.trf.xlu0
        %v578 = vpop.trf.xlu0
        %v579 = vpop.trf.xlu0
        %v580 = vpop.trf.xlu0
        %v581 = vpop.trf.xlu0
        %v582 = vpop.trf.xlu0
        %583 = vxpose.xlu0.b32.start [1/16] %v290, 128
        %584 = vxpose.xlu0.b32.cont [2/16] 0.0, 128
        %585 = vxpose.xlu0.b32.cont [3/16] 0.0, 128
        %586 = vxpose.xlu0.b32.cont [4/16] 0.0, 128
        %587 = vxpose.xlu0.b32.cont [5/16] 0.0, 128
        %588 = vxpose.xlu0.b32.cont [6/16] 0.0, 128
        %589 = vxpose.xlu0.b32.cont [7/16] 0.0, 128
        %590 = vxpose.xlu0.b32.cont [8/16] 0.0, 128
        %591 = vxpose.xlu0.b32.cont [9/16] 0.0, 128
        %592 = vxpose.xlu0.b32.cont [10/16] 0.0, 128
        %593 = vxpose.xlu0.b32.cont [11/16] 0.0, 128
        %594 = vxpose.xlu0.b32.cont [12/16] 0.0, 128
        %595 = vxpose.xlu0.b32.cont [13/16] 0.0, 128
        %596 = vxpose.xlu0.b32.cont [14/16] 0.0, 128
        %597 = vxpose.xlu0.b32.cont [15/16] 0.0, 128
        %598 = vxpose.xlu0.b32.end [16/16] 0.0, 128
        %v599 = vpop.trf.xlu0
        %v600 = vpop.trf.xlu0
        %v601 = vpop.trf.xlu0
        %v602 = vpop.trf.xlu0
        %v603 = vpop.trf.xlu0
        %v604 = vpop.trf.xlu0
        %v605 = vpop.trf.xlu0
        %v606 = vpop.trf.xlu0
        %v607 = vpop.trf.xlu0
        %v608 = vpop.trf.xlu0
        %v609 = vpop.trf.xlu0
        %v610 = vpop.trf.xlu0
        %v611 = vpop.trf.xlu0
        %v612 = vpop.trf.xlu0
        %v613 = vpop.trf.xlu0
        %v614 = vpop.trf.xlu0
        %615 = vxpose.xlu0.b32.start [1/16] %v315, 128
        %616 = vxpose.xlu0.b32.cont [2/16] 0.0, 128
        %617 = vxpose.xlu0.b32.cont [3/16] 0.0, 128
        %618 = vxpose.xlu0.b32.cont [4/16] 0.0, 128
        %619 = vxpose.xlu0.b32.cont [5/16] 0.0, 128
        %620 = vxpose.xlu0.b32.cont [6/16] 0.0, 128
        %621 = vxpose.xlu0.b32.cont [7/16] 0.0, 128
        %622 = vxpose.xlu0.b32.cont [8/16] 0.0, 128
        %623 = vxpose.xlu0.b32.cont [9/16] 0.0, 128
        %624 = vxpose.xlu0.b32.cont [10/16] 0.0, 128
        %625 = vxpose.xlu0.b32.cont [11/16] 0.0, 128
        %626 = vxpose.xlu0.b32.cont [12/16] 0.0, 128
        %627 = vxpose.xlu0.b32.cont [13/16] 0.0, 128
        %628 = vxpose.xlu0.b32.cont [14/16] 0.0, 128
        %629 = vxpose.xlu0.b32.cont [15/16] 0.0, 128
        %630 = vxpose.xlu0.b32.end [16/16] 0.0, 128
        %v631 = vpop.trf.xlu0
        %v632 = vpop.trf.xlu0
        %v633 = vpop.trf.xlu0
        %v634 = vpop.trf.xlu0
        %v635 = vpop.trf.xlu0
        %v636 = vpop.trf.xlu0
        %v637 = vpop.trf.xlu0
        %v638 = vpop.trf.xlu0
        %v639 = vpop.trf.xlu0
        %v640 = vpop.trf.xlu0
        %v641 = vpop.trf.xlu0
        %v642 = vpop.trf.xlu0
        %v643 = vpop.trf.xlu0
        %v644 = vpop.trf.xlu0
        %v645 = vpop.trf.xlu0
        %v646 = vpop.trf.xlu0
        %647 = vxpose.xlu0.b32.start [1/16] %v323, 128
        %648 = vxpose.xlu0.b32.cont [2/16] 0.0, 128
        %649 = vxpose.xlu0.b32.cont [3/16] 0.0, 128
        %650 = vxpose.xlu0.b32.cont [4/16] 0.0, 128
        %651 = vxpose.xlu0.b32.cont [5/16] 0.0, 128
        %652 = vxpose.xlu0.b32.cont [6/16] 0.0, 128
        %653 = vxpose.xlu0.b32.cont [7/16] 0.0, 128
        %654 = vxpose.xlu0.b32.cont [8/16] 0.0, 128
        %655 = vxpose.xlu0.b32.cont [9/16] 0.0, 128
        %656 = vxpose.xlu0.b32.cont [10/16] 0.0, 128
        %657 = vxpose.xlu0.b32.cont [11/16] 0.0, 128
        %658 = vxpose.xlu0.b32.cont [12/16] 0.0, 128
        %659 = vxpose.xlu0.b32.cont [13/16] 0.0, 128
        %660 = vxpose.xlu0.b32.cont [14/16] 0.0, 128
        %661 = vxpose.xlu0.b32.cont [15/16] 0.0, 128
        %662 = vxpose.xlu0.b32.end [16/16] 0.0, 128
        %v663 = vpop.trf.xlu0
        %v664 = vpop.trf.xlu0
        %v665 = vpop.trf.xlu0
        %v666 = vpop.trf.xlu0
        %v667 = vpop.trf.xlu0
        %v668 = vpop.trf.xlu0
        %v669 = vpop.trf.xlu0
        %v670 = vpop.trf.xlu0
        %v671 = vpop.trf.xlu0
        %v672 = vpop.trf.xlu0
        %v673 = vpop.trf.xlu0
        %v674 = vpop.trf.xlu0
        %v675 = vpop.trf.xlu0
        %v676 = vpop.trf.xlu0
        %v677 = vpop.trf.xlu0
        %v678 = vpop.trf.xlu0
        %679 = vxpose.xlu0.b32.start [1/16] %v322, 128
        %680 = vxpose.xlu0.b32.cont [2/16] 0.0, 128
        %681 = vxpose.xlu0.b32.cont [3/16] 0.0, 128
        %682 = vxpose.xlu0.b32.cont [4/16] 0.0, 128
        %683 = vxpose.xlu0.b32.cont [5/16] 0.0, 128
        %684 = vxpose.xlu0.b32.cont [6/16] 0.0, 128
        %685 = vxpose.xlu0.b32.cont [7/16] 0.0, 128
        %686 = vxpose.xlu0.b32.cont [8/16] 0.0, 128
        %687 = vxpose.xlu0.b32.cont [9/16] 0.0, 128
        %688 = vxpose.xlu0.b32.cont [10/16] 0.0, 128
        %689 = vxpose.xlu0.b32.cont [11/16] 0.0, 128
        %690 = vxpose.xlu0.b32.cont [12/16] 0.0, 128
        %691 = vxpose.xlu0.b32.cont [13/16] 0.0, 128
        %692 = vxpose.xlu0.b32.cont [14/16] 0.0, 128
        %693 = vxpose.xlu0.b32.cont [15/16] 0.0, 128
        %694 = vxpose.xlu0.b32.end [16/16] 0.0, 128
        %v695 = vpop.trf.xlu0
        %v696 = vpop.trf.xlu0
        %v697 = vpop.trf.xlu0
        %v698 = vpop.trf.xlu0
        %v699 = vpop.trf.xlu0
        %v700 = vpop.trf.xlu0
        %v701 = vpop.trf.xlu0
        %v702 = vpop.trf.xlu0
        %v703 = vpop.trf.xlu0
        %v704 = vpop.trf.xlu0
        %v705 = vpop.trf.xlu0
        %v706 = vpop.trf.xlu0
        %v707 = vpop.trf.xlu0
        %v708 = vpop.trf.xlu0
        %v709 = vpop.trf.xlu0
        %v710 = vpop.trf.xlu0
        %711 = vxpose.xlu0.b32.start [1/16] %v324, 128
        %712 = vxpose.xlu0.b32.cont [2/16] 0.0, 128
        %713 = vxpose.xlu0.b32.cont [3/16] 0.0, 128
        %714 = vxpose.xlu0.b32.cont [4/16] 0.0, 128
        %715 = vxpose.xlu0.b32.cont [5/16] 0.0, 128
        %716 = vxpose.xlu0.b32.cont [6/16] 0.0, 128
        %717 = vxpose.xlu0.b32.cont [7/16] 0.0, 128
        %718 = vxpose.xlu0.b32.cont [8/16] 0.0, 128
        %719 = vxpose.xlu0.b32.cont [9/16] 0.0, 128
        %720 = vxpose.xlu0.b32.cont [10/16] 0.0, 128
        %721 = vxpose.xlu0.b32.cont [11/16] 0.0, 128
        %722 = vxpose.xlu0.b32.cont [12/16] 0.0, 128
        %723 = vxpose.xlu0.b32.cont [13/16] 0.0, 128
        %724 = vxpose.xlu0.b32.cont [14/16] 0.0, 128
        %725 = vxpose.xlu0.b32.cont [15/16] 0.0, 128
        %726 = vxpose.xlu0.b32.end [16/16] 0.0, 128
        %v727 = vpop.trf.xlu0
        %v728 = vpop.trf.xlu0
        %v729 = vpop.trf.xlu0
        %v730 = vpop.trf.xlu0
        %v731 = vpop.trf.xlu0
        %v732 = vpop.trf.xlu0
        %v733 = vpop.trf.xlu0
        %v734 = vpop.trf.xlu0
        %v735 = vpop.trf.xlu0
        %v736 = vpop.trf.xlu0
        %v737 = vpop.trf.xlu0
        %v738 = vpop.trf.xlu0
        %v739 = vpop.trf.xlu0
        %v740 = vpop.trf.xlu0
        %v741 = vpop.trf.xlu0
        %v742 = vpop.trf.xlu0
        %743 = vxpose.xlu0.b32.start [1/16] %v349, 128
        %744 = vxpose.xlu0.b32.cont [2/16] 0.0, 128
        %745 = vxpose.xlu0.b32.cont [3/16] 0.0, 128
        %746 = vxpose.xlu0.b32.cont [4/16] 0.0, 128
        %747 = vxpose.xlu0.b32.cont [5/16] 0.0, 128
        %748 = vxpose.xlu0.b32.cont [6/16] 0.0, 128
        %749 = vxpose.xlu0.b32.cont [7/16] 0.0, 128
        %750 = vxpose.xlu0.b32.cont [8/16] 0.0, 128
        %751 = vxpose.xlu0.b32.cont [9/16] 0.0, 128
        %752 = vxpose.xlu0.b32.cont [10/16] 0.0, 128
        %753 = vxpose.xlu0.b32.cont [11/16] 0.0, 128
        %754 = vxpose.xlu0.b32.cont [12/16] 0.0, 128
        %755 = vxpose.xlu0.b32.cont [13/16] 0.0, 128
        %756 = vxpose.xlu0.b32.cont [14/16] 0.0, 128
        %757 = vxpose.xlu0.b32.cont [15/16] 0.0, 128
        %758 = vxpose.xlu0.b32.end [16/16] 0.0, 128
        %v759 = vpop.trf.xlu0
        %v760 = vpop.trf.xlu0
        %v761 = vpop.trf.xlu0
        %v762 = vpop.trf.xlu0
        %v763 = vpop.trf.xlu0
        %v764 = vpop.trf.xlu0
        %v765 = vpop.trf.xlu0
        %v766 = vpop.trf.xlu0
        %v767 = vpop.trf.xlu0
        %v768 = vpop.trf.xlu0
        %v769 = vpop.trf.xlu0
        %v770 = vpop.trf.xlu0
        %v771 = vpop.trf.xlu0
        %v772 = vpop.trf.xlu0
        %v773 = vpop.trf.xlu0
        %v774 = vpop.trf.xlu0
        %775 = vxpose.xlu0.b32.start [1/16] %v357, 128
        %776 = vxpose.xlu0.b32.cont [2/16] 0.0, 128
        %777 = vxpose.xlu0.b32.cont [3/16] 0.0, 128
        %778 = vxpose.xlu0.b32.cont [4/16] 0.0, 128
        %779 = vxpose.xlu0.b32.cont [5/16] 0.0, 128
        %780 = vxpose.xlu0.b32.cont [6/16] 0.0, 128
        %781 = vxpose.xlu0.b32.cont [7/16] 0.0, 128
        %782 = vxpose.xlu0.b32.cont [8/16] 0.0, 128
        %783 = vxpose.xlu0.b32.cont [9/16] 0.0, 128
        %784 = vxpose.xlu0.b32.cont [10/16] 0.0, 128
        %785 = vxpose.xlu0.b32.cont [11/16] 0.0, 128
        %786 = vxpose.xlu0.b32.cont [12/16] 0.0, 128
        %787 = vxpose.xlu0.b32.cont [13/16] 0.0, 128
        %788 = vxpose.xlu0.b32.cont [14/16] 0.0, 128
        %789 = vxpose.xlu0.b32.cont [15/16] 0.0, 128
        %790 = vxpose.xlu0.b32.end [16/16] 0.0, 128
        %v791 = vpop.trf.xlu0
        %v792 = vpop.trf.xlu0
        %v793 = vpop.trf.xlu0
        %v794 = vpop.trf.xlu0
        %v795 = vpop.trf.xlu0
        %v796 = vpop.trf.xlu0
        %v797 = vpop.trf.xlu0
        %v798 = vpop.trf.xlu0
        %v799 = vpop.trf.xlu0
        %v800 = vpop.trf.xlu0
        %v801 = vpop.trf.xlu0
        %v802 = vpop.trf.xlu0
        %v803 = vpop.trf.xlu0
        %v804 = vpop.trf.xlu0
        %v805 = vpop.trf.xlu0
        %v806 = vpop.trf.xlu0
        %807 = vxpose.xlu0.b32.start [1/16] %v356, 128
        %808 = vxpose.xlu0.b32.cont [2/16] 0.0, 128
        %809 = vxpose.xlu0.b32.cont [3/16] 0.0, 128
        %810 = vxpose.xlu0.b32.cont [4/16] 0.0, 128
        %811 = vxpose.xlu0.b32.cont [5/16] 0.0, 128
        %812 = vxpose.xlu0.b32.cont [6/16] 0.0, 128
        %813 = vxpose.xlu0.b32.cont [7/16] 0.0, 128
        %814 = vxpose.xlu0.b32.cont [8/16] 0.0, 128
        %815 = vxpose.xlu0.b32.cont [9/16] 0.0, 128
        %816 = vxpose.xlu0.b32.cont [10/16] 0.0, 128
        %817 = vxpose.xlu0.b32.cont [11/16] 0.0, 128
        %818 = vxpose.xlu0.b32.cont [12/16] 0.0, 128
        %819 = vxpose.xlu0.b32.cont [13/16] 0.0, 128
        %820 = vxpose.xlu0.b32.cont [14/16] 0.0, 128
        %821 = vxpose.xlu0.b32.cont [15/16] 0.0, 128
        %822 = vxpose.xlu0.b32.end [16/16] 0.0, 128
        %v823 = vpop.trf.xlu0
        %v824 = vpop.trf.xlu0
        %v825 = vpop.trf.xlu0
        %v826 = vpop.trf.xlu0
        %v827 = vpop.trf.xlu0
        %v828 = vpop.trf.xlu0
        %v829 = vpop.trf.xlu0
        %v830 = vpop.trf.xlu0
        %v831 = vpop.trf.xlu0
        %v832 = vpop.trf.xlu0
        %v833 = vpop.trf.xlu0
        %v834 = vpop.trf.xlu0
        %v835 = vpop.trf.xlu0
        %v836 = vpop.trf.xlu0
        %v837 = vpop.trf.xlu0
        %v838 = vpop.trf.xlu0
        %839 = vxpose.xlu0.b32.start [1/16] %v358, 128
        %840 = vxpose.xlu0.b32.cont [2/16] 0.0, 128
        %841 = vxpose.xlu0.b32.cont [3/16] 0.0, 128
        %842 = vxpose.xlu0.b32.cont [4/16] 0.0, 128
        %843 = vxpose.xlu0.b32.cont [5/16] 0.0, 128
        %844 = vxpose.xlu0.b32.cont [6/16] 0.0, 128
        %845 = vxpose.xlu0.b32.cont [7/16] 0.0, 128
        %846 = vxpose.xlu0.b32.cont [8/16] 0.0, 128
        %847 = vxpose.xlu0.b32.cont [9/16] 0.0, 128
        %848 = vxpose.xlu0.b32.cont [10/16] 0.0, 128
        %849 = vxpose.xlu0.b32.cont [11/16] 0.0, 128
        %850 = vxpose.xlu0.b32.cont [12/16] 0.0, 128
        %851 = vxpose.xlu0.b32.cont [13/16] 0.0, 128
        %852 = vxpose.xlu0.b32.cont [14/16] 0.0, 128
        %853 = vxpose.xlu0.b32.cont [15/16] 0.0, 128
        %854 = vxpose.xlu0.b32.end [16/16] 0.0, 128
        %v855 = vpop.trf.xlu0
        %v856 = vpop.trf.xlu0
        %v857 = vpop.trf.xlu0
        %v858 = vpop.trf.xlu0
        %v859 = vpop.trf.xlu0
        %v860 = vpop.trf.xlu0
        %v861 = vpop.trf.xlu0
        %v862 = vpop.trf.xlu0
        %v863 = vpop.trf.xlu0
        %v864 = vpop.trf.xlu0
        %v865 = vpop.trf.xlu0
        %v866 = vpop.trf.xlu0
        %v867 = vpop.trf.xlu0
        %v868 = vpop.trf.xlu0
        %v869 = vpop.trf.xlu0
        %v870 = vpop.trf.xlu0
        %v887 = vcombine.low %v375, %v407
        %v888 = vcombine.low %v439, %v471
        %v889 = vcombine.low %v503, %v535
        %v890 = vcombine.low %v567, %v599
        %v891 = vcombine.low %v631, %v663
        %v892 = vcombine.low %v695, %v727
        %v893 = vcombine.low %v759, %v791
        %v894 = vcombine.low %v823, %v855
        %903 = vxpose.xlu0.b32.start [1/16] %v887, 128
        %904 = vxpose.xlu0.b32.cont [2/16] %v888, 128
        %905 = vxpose.xlu0.b32.cont [3/16] %v889, 128
        %906 = vxpose.xlu0.b32.cont [4/16] %v890, 128
        %907 = vxpose.xlu0.b32.cont [5/16] %v891, 128
        %908 = vxpose.xlu0.b32.cont [6/16] %v892, 128
        %909 = vxpose.xlu0.b32.cont [7/16] %v893, 128
        %910 = vxpose.xlu0.b32.cont [8/16] %v894, 128
        %911 = vxpose.xlu0.b32.cont [9/16] 0.0, 128
        %912 = vxpose.xlu0.b32.cont [10/16] 0.0, 128
        %913 = vxpose.xlu0.b32.cont [11/16] 0.0, 128
        %914 = vxpose.xlu0.b32.cont [12/16] 0.0, 128
        %915 = vxpose.xlu0.b32.cont [13/16] 0.0, 128
        %916 = vxpose.xlu0.b32.cont [14/16] 0.0, 128
        %917 = vxpose.xlu0.b32.cont [15/16] 0.0, 128
        %918 = vxpose.xlu0.b32.end [16/16] 0.0, 128
        %v919 = vpop.trf.xlu0
        %v920 = vpop.trf.xlu0
        %v921 = vpop.trf.xlu0
        %v922 = vpop.trf.xlu0
        %v923 = vpop.trf.xlu0
        %v924 = vpop.trf.xlu0
        %v925 = vpop.trf.xlu0
        %v926 = vpop.trf.xlu0
        %v927 = vpop.trf.xlu0
        %v928 = vpop.trf.xlu0
        %v929 = vpop.trf.xlu0
        %v930 = vpop.trf.xlu0
        %v931 = vpop.trf.xlu0
        %v932 = vpop.trf.xlu0
        %v933 = vpop.trf.xlu0
        %v934 = vpop.trf.xlu0
        %vm935 = vcmask 519168
        %936 = vst.msk [vmem:[%s177] sm:$0xf] %vm935, %v919
        %s937 = scalar_lea.vmem %s159, 4 [#allocation2]
        %v938 = vld [vmem:[%s937] sm:$0xf]
        %v939 = vld [vmem:[%s937 + $0x8] sm:$0xf]
        %v940 = vld [vmem:[%s937 + $0x10] sm:$0xf]
        %v941 = vld [vmem:[%s937 + $0x18] sm:$0xf]
        %946 = vrot.lane.b32.xlu0 %v938, 124
        %v947 = vpop.permute.xlu0 %946
        %948 = vrot.lane.b32.xlu0 %v939, 124
        %v949 = vpop.permute.xlu0 %948
        %950 = vrot.lane.b32.xlu0 %v940, 124
        %v951 = vpop.permute.xlu0 %950
        %952 = vrot.lane.b32.xlu0 %v941, 124
        %v953 = vpop.permute.xlu0 %952
        %958 = vrot.lane.b32.xlu0 %v938, 120
        %v959 = vpop.permute.xlu0 %958
        %960 = vrot.lane.b32.xlu0 %v939, 120
        %v961 = vpop.permute.xlu0 %960
        %962 = vrot.lane.b32.xlu0 %v940, 120
        %v963 = vpop.permute.xlu0 %962
        %964 = vrot.lane.b32.xlu0 %v941, 120
        %v965 = vpop.permute.xlu0 %964
        %970 = vrot.lane.b32.xlu0 %v938, 116
        %v971 = vpop.permute.xlu0 %970
        %972 = vrot.lane.b32.xlu0 %v939, 116
        %v973 = vpop.permute.xlu0 %972
        %974 = vrot.lane.b32.xlu0 %v940, 116
        %v975 = vpop.permute.xlu0 %974
        %976 = vrot.lane.b32.xlu0 %v941, 116
        %v977 = vpop.permute.xlu0 %976
        %v982 = vcombine.low %v938, %v959
        %v984 = vunpack.c.l.s4 1983009808
        %v985 = vunpack.c.0.s8 %v984
        %v986 = vlaneseq
        %v987 = vshrl.u32 %v986, 7
        %v988 = vsub.s32 %v985, %v987
        %v989 = vrot.slane %v982, %v988
        %v990 = vcombine.low %v947, %v971
        %v992 = vunpack.c.l.s4 1983009808
        %v993 = vunpack.c.0.s8 %v992
        %v994 = vlaneseq
        %v995 = vshrl.u32 %v994, 7
        %v996 = vsub.s32 %v993, %v995
        %v997 = vrot.slane %v990, %v996
        %v998 = vcombine.low %v989, %v997
        %v999 = vcombine.high %v989, %v997
        %v1001 = vunpack.c.l.s4 1934713408
        %v1002 = vunpack.c.0.s8 %v1001
        %v1003 = vlaneseq
        %v1004 = vshrl.u32 %v1003, 7
        %v1005 = vsub.s32 %v1002, %v1004
        %v1006 = vrot.slane %v998, %v1005
        %v1008 = vunpack.c.l.s4 1934713408
        %v1009 = vunpack.c.0.s8 %v1008
        %v1010 = vlaneseq
        %v1011 = vshrl.u32 %v1010, 7
        %v1012 = vsub.s32 %v1009, %v1011
        %v1013 = vrot.slane %v999, %v1012
        %v1014 = vcombine.high %v1006, 0.0
        %v1015 = vcombine.high %v1013, 0.0
        %v1016 = vcombine.low %v939, %v961
        %v1018 = vunpack.c.l.s4 1983009808
        %v1019 = vunpack.c.0.s8 %v1018
        %v1020 = vlaneseq
        %v1021 = vshrl.u32 %v1020, 7
        %v1022 = vsub.s32 %v1019, %v1021
        %v1023 = vrot.slane %v1016, %v1022
        %v1024 = vcombine.low %v949, %v973
        %v1026 = vunpack.c.l.s4 1983009808
        %v1027 = vunpack.c.0.s8 %v1026
        %v1028 = vlaneseq
        %v1029 = vshrl.u32 %v1028, 7
        %v1030 = vsub.s32 %v1027, %v1029
        %v1031 = vrot.slane %v1024, %v1030
        %v1032 = vcombine.low %v1023, %v1031
        %v1033 = vcombine.high %v1023, %v1031
        %v1035 = vunpack.c.l.s4 1934713408
        %v1036 = vunpack.c.0.s8 %v1035
        %v1037 = vlaneseq
        %v1038 = vshrl.u32 %v1037, 7
        %v1039 = vsub.s32 %v1036, %v1038
        %v1040 = vrot.slane %v1032, %v1039
        %v1042 = vunpack.c.l.s4 1934713408
        %v1043 = vunpack.c.0.s8 %v1042
        %v1044 = vlaneseq
        %v1045 = vshrl.u32 %v1044, 7
        %v1046 = vsub.s32 %v1043, %v1045
        %v1047 = vrot.slane %v1033, %v1046
        %v1048 = vcombine.high %v1040, 0.0
        %v1049 = vcombine.high %v1047, 0.0
        %v1050 = vcombine.low %v940, %v963
        %v1052 = vunpack.c.l.s4 1983009808
        %v1053 = vunpack.c.0.s8 %v1052
        %v1054 = vlaneseq
        %v1055 = vshrl.u32 %v1054, 7
        %v1056 = vsub.s32 %v1053, %v1055
        %v1057 = vrot.slane %v1050, %v1056
        %v1058 = vcombine.low %v951, %v975
        %v1060 = vunpack.c.l.s4 1983009808
        %v1061 = vunpack.c.0.s8 %v1060
        %v1062 = vlaneseq
        %v1063 = vshrl.u32 %v1062, 7
        %v1064 = vsub.s32 %v1061, %v1063
        %v1065 = vrot.slane %v1058, %v1064
        %v1066 = vcombine.low %v1057, %v1065
        %v1067 = vcombine.high %v1057, %v1065
        %v1069 = vunpack.c.l.s4 1934713408
        %v1070 = vunpack.c.0.s8 %v1069
        %v1071 = vlaneseq
        %v1072 = vshrl.u32 %v1071, 7
        %v1073 = vsub.s32 %v1070, %v1072
        %v1074 = vrot.slane %v1066, %v1073
        %v1076 = vunpack.c.l.s4 1934713408
        %v1077 = vunpack.c.0.s8 %v1076
        %v1078 = vlaneseq
        %v1079 = vshrl.u32 %v1078, 7
        %v1080 = vsub.s32 %v1077, %v1079
        %v1081 = vrot.slane %v1067, %v1080
        %v1082 = vcombine.high %v1074, 0.0
        %v1083 = vcombine.high %v1081, 0.0
        %v1084 = vcombine.low %v941, %v965
        %v1086 = vunpack.c.l.s4 1983009808
        %v1087 = vunpack.c.0.s8 %v1086
        %v1088 = vlaneseq
        %v1089 = vshrl.u32 %v1088, 7
        %v1090 = vsub.s32 %v1087, %v1089
        %v1091 = vrot.slane %v1084, %v1090
        %v1092 = vcombine.low %v953, %v977
        %v1094 = vunpack.c.l.s4 1983009808
        %v1095 = vunpack.c.0.s8 %v1094
        %v1096 = vlaneseq
        %v1097 = vshrl.u32 %v1096, 7
        %v1098 = vsub.s32 %v1095, %v1097
        %v1099 = vrot.slane %v1092, %v1098
        %v1100 = vcombine.low %v1091, %v1099
        %v1101 = vcombine.high %v1091, %v1099
        %v1103 = vunpack.c.l.s4 1934713408
        %v1104 = vunpack.c.0.s8 %v1103
        %v1105 = vlaneseq
        %v1106 = vshrl.u32 %v1105, 7
        %v1107 = vsub.s32 %v1104, %v1106
        %v1108 = vrot.slane %v1100, %v1107
        %v1110 = vunpack.c.l.s4 1934713408
        %v1111 = vunpack.c.0.s8 %v1110
        %v1112 = vlaneseq
        %v1113 = vshrl.u32 %v1112, 7
        %v1114 = vsub.s32 %v1111, %v1113
        %v1115 = vrot.slane %v1101, %v1114
        %v1116 = vcombine.high %v1108, 0.0
        %v1117 = vcombine.high %v1115, 0.0
        %1118 = vxpose.xlu0.b32.start [1/16] %v1006, 128
        %1119 = vxpose.xlu0.b32.cont [2/16] 0.0, 128
        %1120 = vxpose.xlu0.b32.cont [3/16] 0.0, 128
        %1121 = vxpose.xlu0.b32.cont [4/16] 0.0, 128
        %1122 = vxpose.xlu0.b32.cont [5/16] 0.0, 128
        %1123 = vxpose.xlu0.b32.cont [6/16] 0.0, 128
        %1124 = vxpose.xlu0.b32.cont [7/16] 0.0, 128
        %1125 = vxpose.xlu0.b32.cont [8/16] 0.0, 128
        %1126 = vxpose.xlu0.b32.cont [9/16] 0.0, 128
        %1127 = vxpose.xlu0.b32.cont [10/16] 0.0, 128
        %1128 = vxpose.xlu0.b32.cont [11/16] 0.0, 128
        %1129 = vxpose.xlu0.b32.cont [12/16] 0.0, 128
        %1130 = vxpose.xlu0.b32.cont [13/16] 0.0, 128
        %1131 = vxpose.xlu0.b32.cont [14/16] 0.0, 128
        %1132 = vxpose.xlu0.b32.cont [15/16] 0.0, 128
        %1133 = vxpose.xlu0.b32.end [16/16] 0.0, 128
        %v1134 = vpop.trf.xlu0
        %v1135 = vpop.trf.xlu0
        %v1136 = vpop.trf.xlu0
        %v1137 = vpop.trf.xlu0
        %v1138 = vpop.trf.xlu0
        %v1139 = vpop.trf.xlu0
        %v1140 = vpop.trf.xlu0
        %v1141 = vpop.trf.xlu0
        %v1142 = vpop.trf.xlu0
        %v1143 = vpop.trf.xlu0
        %v1144 = vpop.trf.xlu0
        %v1145 = vpop.trf.xlu0
        %v1146 = vpop.trf.xlu0
        %v1147 = vpop.trf.xlu0
        %v1148 = vpop.trf.xlu0
        %v1149 = vpop.trf.xlu0
        %1150 = vxpose.xlu0.b32.start [1/16] %v1014, 128
        %1151 = vxpose.xlu0.b32.cont [2/16] 0.0, 128
        %1152 = vxpose.xlu0.b32.cont [3/16] 0.0, 128
        %1153 = vxpose.xlu0.b32.cont [4/16] 0.0, 128
        %1154 = vxpose.xlu0.b32.cont [5/16] 0.0, 128
        %1155 = vxpose.xlu0.b32.cont [6/16] 0.0, 128
        %1156 = vxpose.xlu0.b32.cont [7/16] 0.0, 128
        %1157 = vxpose.xlu0.b32.cont [8/16] 0.0, 128
        %1158 = vxpose.xlu0.b32.cont [9/16] 0.0, 128
        %1159 = vxpose.xlu0.b32.cont [10/16] 0.0, 128
        %1160 = vxpose.xlu0.b32.cont [11/16] 0.0, 128
        %1161 = vxpose.xlu0.b32.cont [12/16] 0.0, 128
        %1162 = vxpose.xlu0.b32.cont [13/16] 0.0, 128
        %1163 = vxpose.xlu0.b32.cont [14/16] 0.0, 128
        %1164 = vxpose.xlu0.b32.cont [15/16] 0.0, 128
        %1165 = vxpose.xlu0.b32.end [16/16] 0.0, 128
        %v1166 = vpop.trf.xlu0
        %v1167 = vpop.trf.xlu0
        %v1168 = vpop.trf.xlu0
        %v1169 = vpop.trf.xlu0
        %v1170 = vpop.trf.xlu0
        %v1171 = vpop.trf.xlu0
        %v1172 = vpop.trf.xlu0
        %v1173 = vpop.trf.xlu0
        %v1174 = vpop.trf.xlu0
        %v1175 = vpop.trf.xlu0
        %v1176 = vpop.trf.xlu0
        %v1177 = vpop.trf.xlu0
        %v1178 = vpop.trf.xlu0
        %v1179 = vpop.trf.xlu0
        %v1180 = vpop.trf.xlu0
        %v1181 = vpop.trf.xlu0
        %1182 = vxpose.xlu0.b32.start [1/16] %v1013, 128
        %1183 = vxpose.xlu0.b32.cont [2/16] 0.0, 128
        %1184 = vxpose.xlu0.b32.cont [3/16] 0.0, 128
        %1185 = vxpose.xlu0.b32.cont [4/16] 0.0, 128
        %1186 = vxpose.xlu0.b32.cont [5/16] 0.0, 128
        %1187 = vxpose.xlu0.b32.cont [6/16] 0.0, 128
        %1188 = vxpose.xlu0.b32.cont [7/16] 0.0, 128
        %1189 = vxpose.xlu0.b32.cont [8/16] 0.0, 128
        %1190 = vxpose.xlu0.b32.cont [9/16] 0.0, 128
        %1191 = vxpose.xlu0.b32.cont [10/16] 0.0, 128
        %1192 = vxpose.xlu0.b32.cont [11/16] 0.0, 128
        %1193 = vxpose.xlu0.b32.cont [12/16] 0.0, 128
        %1194 = vxpose.xlu0.b32.cont [13/16] 0.0, 128
        %1195 = vxpose.xlu0.b32.cont [14/16] 0.0, 128
        %1196 = vxpose.xlu0.b32.cont [15/16] 0.0, 128
        %1197 = vxpose.xlu0.b32.end [16/16] 0.0, 128
        %v1198 = vpop.trf.xlu0
        %v1199 = vpop.trf.xlu0
        %v1200 = vpop.trf.xlu0
        %v1201 = vpop.trf.xlu0
        %v1202 = vpop.trf.xlu0
        %v1203 = vpop.trf.xlu0
        %v1204 = vpop.trf.xlu0
        %v1205 = vpop.trf.xlu0
        %v1206 = vpop.trf.xlu0
        %v1207 = vpop.trf.xlu0
        %v1208 = vpop.trf.xlu0
        %v1209 = vpop.trf.xlu0
        %v1210 = vpop.trf.xlu0
        %v1211 = vpop.trf.xlu0
        %v1212 = vpop.trf.xlu0
        %v1213 = vpop.trf.xlu0
        %1214 = vxpose.xlu0.b32.start [1/16] %v1015, 128
        %1215 = vxpose.xlu0.b32.cont [2/16] 0.0, 128
        %1216 = vxpose.xlu0.b32.cont [3/16] 0.0, 128
        %1217 = vxpose.xlu0.b32.cont [4/16] 0.0, 128
        %1218 = vxpose.xlu0.b32.cont [5/16] 0.0, 128
        %1219 = vxpose.xlu0.b32.cont [6/16] 0.0, 128
        %1220 = vxpose.xlu0.b32.cont [7/16] 0.0, 128
        %1221 = vxpose.xlu0.b32.cont [8/16] 0.0, 128
        %1222 = vxpose.xlu0.b32.cont [9/16] 0.0, 128
        %1223 = vxpose.xlu0.b32.cont [10/16] 0.0, 128
        %1224 = vxpose.xlu0.b32.cont [11/16] 0.0, 128
        %1225 = vxpose.xlu0.b32.cont [12/16] 0.0, 128
        %1226 = vxpose.xlu0.b32.cont [13/16] 0.0, 128
        %1227 = vxpose.xlu0.b32.cont [14/16] 0.0, 128
        %1228 = vxpose.xlu0.b32.cont [15/16] 0.0, 128
        %1229 = vxpose.xlu0.b32.end [16/16] 0.0, 128
        %v1230 = vpop.trf.xlu0
        %v1231 = vpop.trf.xlu0
        %v1232 = vpop.trf.xlu0
        %v1233 = vpop.trf.xlu0
        %v1234 = vpop.trf.xlu0
        %v1235 = vpop.trf.xlu0
        %v1236 = vpop.trf.xlu0
        %v1237 = vpop.trf.xlu0
        %v1238 = vpop.trf.xlu0
        %v1239 = vpop.trf.xlu0
        %v1240 = vpop.trf.xlu0
        %v1241 = vpop.trf.xlu0
        %v1242 = vpop.trf.xlu0
        %v1243 = vpop.trf.xlu0
        %v1244 = vpop.trf.xlu0
        %v1245 = vpop.trf.xlu0
        %1246 = vxpose.xlu0.b32.start [1/16] %v1040, 128
        %1247 = vxpose.xlu0.b32.cont [2/16] 0.0, 128
        %1248 = vxpose.xlu0.b32.cont [3/16] 0.0, 128
        %1249 = vxpose.xlu0.b32.cont [4/16] 0.0, 128
        %1250 = vxpose.xlu0.b32.cont [5/16] 0.0, 128
        %1251 = vxpose.xlu0.b32.cont [6/16] 0.0, 128
        %1252 = vxpose.xlu0.b32.cont [7/16] 0.0, 128
        %1253 = vxpose.xlu0.b32.cont [8/16] 0.0, 128
        %1254 = vxpose.xlu0.b32.cont [9/16] 0.0, 128
        %1255 = vxpose.xlu0.b32.cont [10/16] 0.0, 128
        %1256 = vxpose.xlu0.b32.cont [11/16] 0.0, 128
        %1257 = vxpose.xlu0.b32.cont [12/16] 0.0, 128
        %1258 = vxpose.xlu0.b32.cont [13/16] 0.0, 128
        %1259 = vxpose.xlu0.b32.cont [14/16] 0.0, 128
        %1260 = vxpose.xlu0.b32.cont [15/16] 0.0, 128
        %1261 = vxpose.xlu0.b32.end [16/16] 0.0, 128
        %v1262 = vpop.trf.xlu0
        %v1263 = vpop.trf.xlu0
        %v1264 = vpop.trf.xlu0
        %v1265 = vpop.trf.xlu0
        %v1266 = vpop.trf.xlu0
        %v1267 = vpop.trf.xlu0
        %v1268 = vpop.trf.xlu0
        %v1269 = vpop.trf.xlu0
        %v1270 = vpop.trf.xlu0
        %v1271 = vpop.trf.xlu0
        %v1272 = vpop.trf.xlu0
        %v1273 = vpop.trf.xlu0
        %v1274 = vpop.trf.xlu0
        %v1275 = vpop.trf.xlu0
        %v1276 = vpop.trf.xlu0
        %v1277 = vpop.trf.xlu0
        %1278 = vxpose.xlu0.b32.start [1/16] %v1048, 128
        %1279 = vxpose.xlu0.b32.cont [2/16] 0.0, 128
        %1280 = vxpose.xlu0.b32.cont [3/16] 0.0, 128
        %1281 = vxpose.xlu0.b32.cont [4/16] 0.0, 128
        %1282 = vxpose.xlu0.b32.cont [5/16] 0.0, 128
        %1283 = vxpose.xlu0.b32.cont [6/16] 0.0, 128
        %1284 = vxpose.xlu0.b32.cont [7/16] 0.0, 128
        %1285 = vxpose.xlu0.b32.cont [8/16] 0.0, 128
        %1286 = vxpose.xlu0.b32.cont [9/16] 0.0, 128
        %1287 = vxpose.xlu0.b32.cont [10/16] 0.0, 128
        %1288 = vxpose.xlu0.b32.cont [11/16] 0.0, 128
        %1289 = vxpose.xlu0.b32.cont [12/16] 0.0, 128
        %1290 = vxpose.xlu0.b32.cont [13/16] 0.0, 128
        %1291 = vxpose.xlu0.b32.cont [14/16] 0.0, 128
        %1292 = vxpose.xlu0.b32.cont [15/16] 0.0, 128
        %1293 = vxpose.xlu0.b32.end [16/16] 0.0, 128
        %v1294 = vpop.trf.xlu0
        %v1295 = vpop.trf.xlu0
        %v1296 = vpop.trf.xlu0
        %v1297 = vpop.trf.xlu0
        %v1298 = vpop.trf.xlu0
        %v1299 = vpop.trf.xlu0
        %v1300 = vpop.trf.xlu0
        %v1301 = vpop.trf.xlu0
        %v1302 = vpop.trf.xlu0
        %v1303 = vpop.trf.xlu0
        %v1304 = vpop.trf.xlu0
        %v1305 = vpop.trf.xlu0
        %v1306 = vpop.trf.xlu0
        %v1307 = vpop.trf.xlu0
        %v1308 = vpop.trf.xlu0
        %v1309 = vpop.trf.xlu0
        %1310 = vxpose.xlu0.b32.start [1/16] %v1047, 128
        %1311 = vxpose.xlu0.b32.cont [2/16] 0.0, 128
        %1312 = vxpose.xlu0.b32.cont [3/16] 0.0, 128
        %1313 = vxpose.xlu0.b32.cont [4/16] 0.0, 128
        %1314 = vxpose.xlu0.b32.cont [5/16] 0.0, 128
        %1315 = vxpose.xlu0.b32.cont [6/16] 0.0, 128
        %1316 = vxpose.xlu0.b32.cont [7/16] 0.0, 128
        %1317 = vxpose.xlu0.b32.cont [8/16] 0.0, 128
        %1318 = vxpose.xlu0.b32.cont [9/16] 0.0, 128
        %1319 = vxpose.xlu0.b32.cont [10/16] 0.0, 128
        %1320 = vxpose.xlu0.b32.cont [11/16] 0.0, 128
        %1321 = vxpose.xlu0.b32.cont [12/16] 0.0, 128
        %1322 = vxpose.xlu0.b32.cont [13/16] 0.0, 128
        %1323 = vxpose.xlu0.b32.cont [14/16] 0.0, 128
        %1324 = vxpose.xlu0.b32.cont [15/16] 0.0, 128
        %1325 = vxpose.xlu0.b32.end [16/16] 0.0, 128
        %v1326 = vpop.trf.xlu0
        %v1327 = vpop.trf.xlu0
        %v1328 = vpop.trf.xlu0
        %v1329 = vpop.trf.xlu0
        %v1330 = vpop.trf.xlu0
        %v1331 = vpop.trf.xlu0
        %v1332 = vpop.trf.xlu0
        %v1333 = vpop.trf.xlu0
        %v1334 = vpop.trf.xlu0
        %v1335 = vpop.trf.xlu0
        %v1336 = vpop.trf.xlu0
        %v1337 = vpop.trf.xlu0
        %v1338 = vpop.trf.xlu0
        %v1339 = vpop.trf.xlu0
        %v1340 = vpop.trf.xlu0
        %v1341 = vpop.trf.xlu0
        %1342 = vxpose.xlu0.b32.start [1/16] %v1049, 128
        %1343 = vxpose.xlu0.b32.cont [2/16] 0.0, 128
        %1344 = vxpose.xlu0.b32.cont [3/16] 0.0, 128
        %1345 = vxpose.xlu0.b32.cont [4/16] 0.0, 128
        %1346 = vxpose.xlu0.b32.cont [5/16] 0.0, 128
        %1347 = vxpose.xlu0.b32.cont [6/16] 0.0, 128
        %1348 = vxpose.xlu0.b32.cont [7/16] 0.0, 128
        %1349 = vxpose.xlu0.b32.cont [8/16] 0.0, 128
        %1350 = vxpose.xlu0.b32.cont [9/16] 0.0, 128
        %1351 = vxpose.xlu0.b32.cont [10/16] 0.0, 128
        %1352 = vxpose.xlu0.b32.cont [11/16] 0.0, 128
        %1353 = vxpose.xlu0.b32.cont [12/16] 0.0, 128
        %1354 = vxpose.xlu0.b32.cont [13/16] 0.0, 128
        %1355 = vxpose.xlu0.b32.cont [14/16] 0.0, 128
        %1356 = vxpose.xlu0.b32.cont [15/16] 0.0, 128
        %1357 = vxpose.xlu0.b32.end [16/16] 0.0, 128
        %v1358 = vpop.trf.xlu0
        %v1359 = vpop.trf.xlu0
        %v1360 = vpop.trf.xlu0
        %v1361 = vpop.trf.xlu0
        %v1362 = vpop.trf.xlu0
        %v1363 = vpop.trf.xlu0
        %v1364 = vpop.trf.xlu0
        %v1365 = vpop.trf.xlu0
        %v1366 = vpop.trf.xlu0
        %v1367 = vpop.trf.xlu0
        %v1368 = vpop.trf.xlu0
        %v1369 = vpop.trf.xlu0
        %v1370 = vpop.trf.xlu0
        %v1371 = vpop.trf.xlu0
        %v1372 = vpop.trf.xlu0
        %v1373 = vpop.trf.xlu0
        %1374 = vxpose.xlu0.b32.start [1/16] %v1074, 128
        %1375 = vxpose.xlu0.b32.cont [2/16] 0.0, 128
        %1376 = vxpose.xlu0.b32.cont [3/16] 0.0, 128
        %1377 = vxpose.xlu0.b32.cont [4/16] 0.0, 128
        %1378 = vxpose.xlu0.b32.cont [5/16] 0.0, 128
        %1379 = vxpose.xlu0.b32.cont [6/16] 0.0, 128
        %1380 = vxpose.xlu0.b32.cont [7/16] 0.0, 128
        %1381 = vxpose.xlu0.b32.cont [8/16] 0.0, 128
        %1382 = vxpose.xlu0.b32.cont [9/16] 0.0, 128
        %1383 = vxpose.xlu0.b32.cont [10/16] 0.0, 128
        %1384 = vxpose.xlu0.b32.cont [11/16] 0.0, 128
        %1385 = vxpose.xlu0.b32.cont [12/16] 0.0, 128
        %1386 = vxpose.xlu0.b32.cont [13/16] 0.0, 128
        %1387 = vxpose.xlu0.b32.cont [14/16] 0.0, 128
        %1388 = vxpose.xlu0.b32.cont [15/16] 0.0, 128
        %1389 = vxpose.xlu0.b32.end [16/16] 0.0, 128
        %v1390 = vpop.trf.xlu0
        %v1391 = vpop.trf.xlu0
        %v1392 = vpop.trf.xlu0
        %v1393 = vpop.trf.xlu0
        %v1394 = vpop.trf.xlu0
        %v1395 = vpop.trf.xlu0
        %v1396 = vpop.trf.xlu0
        %v1397 = vpop.trf.xlu0
        %v1398 = vpop.trf.xlu0
        %v1399 = vpop.trf.xlu0
        %v1400 = vpop.trf.xlu0
        %v1401 = vpop.trf.xlu0
        %v1402 = vpop.trf.xlu0
        %v1403 = vpop.trf.xlu0
        %v1404 = vpop.trf.xlu0
        %v1405 = vpop.trf.xlu0
        %1406 = vxpose.xlu0.b32.start [1/16] %v1082, 128
        %1407 = vxpose.xlu0.b32.cont [2/16] 0.0, 128
        %1408 = vxpose.xlu0.b32.cont [3/16] 0.0, 128
        %1409 = vxpose.xlu0.b32.cont [4/16] 0.0, 128
        %1410 = vxpose.xlu0.b32.cont [5/16] 0.0, 128
        %1411 = vxpose.xlu0.b32.cont [6/16] 0.0, 128
        %1412 = vxpose.xlu0.b32.cont [7/16] 0.0, 128
        %1413 = vxpose.xlu0.b32.cont [8/16] 0.0, 128
        %1414 = vxpose.xlu0.b32.cont [9/16] 0.0, 128
        %1415 = vxpose.xlu0.b32.cont [10/16] 0.0, 128
        %1416 = vxpose.xlu0.b32.cont [11/16] 0.0, 128
        %1417 = vxpose.xlu0.b32.cont [12/16] 0.0, 128
        %1418 = vxpose.xlu0.b32.cont [13/16] 0.0, 128
        %1419 = vxpose.xlu0.b32.cont [14/16] 0.0, 128
        %1420 = vxpose.xlu0.b32.cont [15/16] 0.0, 128
        %1421 = vxpose.xlu0.b32.end [16/16] 0.0, 128
        %v1422 = vpop.trf.xlu0
        %v1423 = vpop.trf.xlu0
        %v1424 = vpop.trf.xlu0
        %v1425 = vpop.trf.xlu0
        %v1426 = vpop.trf.xlu0
        %v1427 = vpop.trf.xlu0
        %v1428 = vpop.trf.xlu0
        %v1429 = vpop.trf.xlu0
        %v1430 = vpop.trf.xlu0
        %v1431 = vpop.trf.xlu0
        %v1432 = vpop.trf.xlu0
        %v1433 = vpop.trf.xlu0
        %v1434 = vpop.trf.xlu0
        %v1435 = vpop.trf.xlu0
        %v1436 = vpop.trf.xlu0
        %v1437 = vpop.trf.xlu0
        %1438 = vxpose.xlu0.b32.start [1/16] %v1081, 128
        %1439 = vxpose.xlu0.b32.cont [2/16] 0.0, 128
        %1440 = vxpose.xlu0.b32.cont [3/16] 0.0, 128
        %1441 = vxpose.xlu0.b32.cont [4/16] 0.0, 128
        %1442 = vxpose.xlu0.b32.cont [5/16] 0.0, 128
        %1443 = vxpose.xlu0.b32.cont [6/16] 0.0, 128
        %1444 = vxpose.xlu0.b32.cont [7/16] 0.0, 128
        %1445 = vxpose.xlu0.b32.cont [8/16] 0.0, 128
        %1446 = vxpose.xlu0.b32.cont [9/16] 0.0, 128
        %1447 = vxpose.xlu0.b32.cont [10/16] 0.0, 128
        %1448 = vxpose.xlu0.b32.cont [11/16] 0.0, 128
        %1449 = vxpose.xlu0.b32.cont [12/16] 0.0, 128
        %1450 = vxpose.xlu0.b32.cont [13/16] 0.0, 128
        %1451 = vxpose.xlu0.b32.cont [14/16] 0.0, 128
        %1452 = vxpose.xlu0.b32.cont [15/16] 0.0, 128
        %1453 = vxpose.xlu0.b32.end [16/16] 0.0, 128
        %v1454 = vpop.trf.xlu0
        %v1455 = vpop.trf.xlu0
        %v1456 = vpop.trf.xlu0
        %v1457 = vpop.trf.xlu0
        %v1458 = vpop.trf.xlu0
        %v1459 = vpop.trf.xlu0
        %v1460 = vpop.trf.xlu0
        %v1461 = vpop.trf.xlu0
        %v1462 = vpop.trf.xlu0
        %v1463 = vpop.trf.xlu0
        %v1464 = vpop.trf.xlu0
        %v1465 = vpop.trf.xlu0
        %v1466 = vpop.trf.xlu0
        %v1467 = vpop.trf.xlu0
        %v1468 = vpop.trf.xlu0
        %v1469 = vpop.trf.xlu0
        %1470 = vxpose.xlu0.b32.start [1/16] %v1083, 128
        %1471 = vxpose.xlu0.b32.cont [2/16] 0.0, 128
        %1472 = vxpose.xlu0.b32.cont [3/16] 0.0, 128
        %1473 = vxpose.xlu0.b32.cont [4/16] 0.0, 128
        %1474 = vxpose.xlu0.b32.cont [5/16] 0.0, 128
        %1475 = vxpose.xlu0.b32.cont [6/16] 0.0, 128
        %1476 = vxpose.xlu0.b32.cont [7/16] 0.0, 128
        %1477 = vxpose.xlu0.b32.cont [8/16] 0.0, 128
        %1478 = vxpose.xlu0.b32.cont [9/16] 0.0, 128
        %1479 = vxpose.xlu0.b32.cont [10/16] 0.0, 128
        %1480 = vxpose.xlu0.b32.cont [11/16] 0.0, 128
        %1481 = vxpose.xlu0.b32.cont [12/16] 0.0, 128
        %1482 = vxpose.xlu0.b32.cont [13/16] 0.0, 128
        %1483 = vxpose.xlu0.b32.cont [14/16] 0.0, 128
        %1484 = vxpose.xlu0.b32.cont [15/16] 0.0, 128
        %1485 = vxpose.xlu0.b32.end [16/16] 0.0, 128
        %v1486 = vpop.trf.xlu0
        %v1487 = vpop.trf.xlu0
        %v1488 = vpop.trf.xlu0
        %v1489 = vpop.trf.xlu0
        %v1490 = vpop.trf.xlu0
        %v1491 = vpop.trf.xlu0
        %v1492 = vpop.trf.xlu0
        %v1493 = vpop.trf.xlu0
        %v1494 = vpop.trf.xlu0
        %v1495 = vpop.trf.xlu0
        %v1496 = vpop.trf.xlu0
        %v1497 = vpop.trf.xlu0
        %v1498 = vpop.trf.xlu0
        %v1499 = vpop.trf.xlu0
        %v1500 = vpop.trf.xlu0
        %v1501 = vpop.trf.xlu0
        %1502 = vxpose.xlu0.b32.start [1/16] %v1108, 128
        %1503 = vxpose.xlu0.b32.cont [2/16] 0.0, 128
        %1504 = vxpose.xlu0.b32.cont [3/16] 0.0, 128
        %1505 = vxpose.xlu0.b32.cont [4/16] 0.0, 128
        %1506 = vxpose.xlu0.b32.cont [5/16] 0.0, 128
        %1507 = vxpose.xlu0.b32.cont [6/16] 0.0, 128
        %1508 = vxpose.xlu0.b32.cont [7/16] 0.0, 128
        %1509 = vxpose.xlu0.b32.cont [8/16] 0.0, 128
        %1510 = vxpose.xlu0.b32.cont [9/16] 0.0, 128
        %1511 = vxpose.xlu0.b32.cont [10/16] 0.0, 128
        %1512 = vxpose.xlu0.b32.cont [11/16] 0.0, 128
        %1513 = vxpose.xlu0.b32.cont [12/16] 0.0, 128
        %1514 = vxpose.xlu0.b32.cont [13/16] 0.0, 128
        %1515 = vxpose.xlu0.b32.cont [14/16] 0.0, 128
        %1516 = vxpose.xlu0.b32.cont [15/16] 0.0, 128
        %1517 = vxpose.xlu0.b32.end [16/16] 0.0, 128
        %v1518 = vpop.trf.xlu0
        %v1519 = vpop.trf.xlu0
        %v1520 = vpop.trf.xlu0
        %v1521 = vpop.trf.xlu0
        %v1522 = vpop.trf.xlu0
        %v1523 = vpop.trf.xlu0
        %v1524 = vpop.trf.xlu0
        %v1525 = vpop.trf.xlu0
        %v1526 = vpop.trf.xlu0
        %v1527 = vpop.trf.xlu0
        %v1528 = vpop.trf.xlu0
        %v1529 = vpop.trf.xlu0
        %v1530 = vpop.trf.xlu0
        %v1531 = vpop.trf.xlu0
        %v1532 = vpop.trf.xlu0
        %v1533 = vpop.trf.xlu0
        %1534 = vxpose.xlu0.b32.start [1/16] %v1116, 128
        %1535 = vxpose.xlu0.b32.cont [2/16] 0.0, 128
        %1536 = vxpose.xlu0.b32.cont [3/16] 0.0, 128
        %1537 = vxpose.xlu0.b32.cont [4/16] 0.0, 128
        %1538 = vxpose.xlu0.b32.cont [5/16] 0.0, 128
        %1539 = vxpose.xlu0.b32.cont [6/16] 0.0, 128
        %1540 = vxpose.xlu0.b32.cont [7/16] 0.0, 128
        %1541 = vxpose.xlu0.b32.cont [8/16] 0.0, 128
        %1542 = vxpose.xlu0.b32.cont [9/16] 0.0, 128
        %1543 = vxpose.xlu0.b32.cont [10/16] 0.0, 128
        %1544 = vxpose.xlu0.b32.cont [11/16] 0.0, 128
        %1545 = vxpose.xlu0.b32.cont [12/16] 0.0, 128
        %1546 = vxpose.xlu0.b32.cont [13/16] 0.0, 128
        %1547 = vxpose.xlu0.b32.cont [14/16] 0.0, 128
        %1548 = vxpose.xlu0.b32.cont [15/16] 0.0, 128
        %1549 = vxpose.xlu0.b32.end [16/16] 0.0, 128
        %v1550 = vpop.trf.xlu0
        %v1551 = vpop.trf.xlu0
        %v1552 = vpop.trf.xlu0
        %v1553 = vpop.trf.xlu0
        %v1554 = vpop.trf.xlu0
        %v1555 = vpop.trf.xlu0
        %v1556 = vpop.trf.xlu0
        %v1557 = vpop.trf.xlu0
        %v1558 = vpop.trf.xlu0
        %v1559 = vpop.trf.xlu0
        %v1560 = vpop.trf.xlu0
        %v1561 = vpop.trf.xlu0
        %v1562 = vpop.trf.xlu0
        %v1563 = vpop.trf.xlu0
        %v1564 = vpop.trf.xlu0
        %v1565 = vpop.trf.xlu0
        %1566 = vxpose.xlu0.b32.start [1/16] %v1115, 128
        %1567 = vxpose.xlu0.b32.cont [2/16] 0.0, 128
        %1568 = vxpose.xlu0.b32.cont [3/16] 0.0, 128
        %1569 = vxpose.xlu0.b32.cont [4/16] 0.0, 128
        %1570 = vxpose.xlu0.b32.cont [5/16] 0.0, 128
        %1571 = vxpose.xlu0.b32.cont [6/16] 0.0, 128
        %1572 = vxpose.xlu0.b32.cont [7/16] 0.0, 128
        %1573 = vxpose.xlu0.b32.cont [8/16] 0.0, 128
        %1574 = vxpose.xlu0.b32.cont [9/16] 0.0, 128
        %1575 = vxpose.xlu0.b32.cont [10/16] 0.0, 128
        %1576 = vxpose.xlu0.b32.cont [11/16] 0.0, 128
        %1577 = vxpose.xlu0.b32.cont [12/16] 0.0, 128
        %1578 = vxpose.xlu0.b32.cont [13/16] 0.0, 128
        %1579 = vxpose.xlu0.b32.cont [14/16] 0.0, 128
        %1580 = vxpose.xlu0.b32.cont [15/16] 0.0, 128
        %1581 = vxpose.xlu0.b32.end [16/16] 0.0, 128
        %v1582 = vpop.trf.xlu0
        %v1583 = vpop.trf.xlu0
        %v1584 = vpop.trf.xlu0
        %v1585 = vpop.trf.xlu0
        %v1586 = vpop.trf.xlu0
        %v1587 = vpop.trf.xlu0
        %v1588 = vpop.trf.xlu0
        %v1589 = vpop.trf.xlu0
        %v1590 = vpop.trf.xlu0
        %v1591 = vpop.trf.xlu0
        %v1592 = vpop.trf.xlu0
        %v1593 = vpop.trf.xlu0
        %v1594 = vpop.trf.xlu0
        %v1595 = vpop.trf.xlu0
        %v1596 = vpop.trf.xlu0
        %v1597 = vpop.trf.xlu0
        %1598 = vxpose.xlu0.b32.start [1/16] %v1117, 128
        %1599 = vxpose.xlu0.b32.cont [2/16] 0.0, 128
        %1600 = vxpose.xlu0.b32.cont [3/16] 0.0, 128
        %1601 = vxpose.xlu0.b32.cont [4/16] 0.0, 128
        %1602 = vxpose.xlu0.b32.cont [5/16] 0.0, 128
        %1603 = vxpose.xlu0.b32.cont [6/16] 0.0, 128
        %1604 = vxpose.xlu0.b32.cont [7/16] 0.0, 128
        %1605 = vxpose.xlu0.b32.cont [8/16] 0.0, 128
        %1606 = vxpose.xlu0.b32.cont [9/16] 0.0, 128
        %1607 = vxpose.xlu0.b32.cont [10/16] 0.0, 128
        %1608 = vxpose.xlu0.b32.cont [11/16] 0.0, 128
        %1609 = vxpose.xlu0.b32.cont [12/16] 0.0, 128
        %1610 = vxpose.xlu0.b32.cont [13/16] 0.0, 128
        %1611 = vxpose.xlu0.b32.cont [14/16] 0.0, 128
        %1612 = vxpose.xlu0.b32.cont [15/16] 0.0, 128
        %1613 = vxpose.xlu0.b32.end [16/16] 0.0, 128
        %v1614 = vpop.trf.xlu0
        %v1615 = vpop.trf.xlu0
        %v1616 = vpop.trf.xlu0
        %v1617 = vpop.trf.xlu0
        %v1618 = vpop.trf.xlu0
        %v1619 = vpop.trf.xlu0
        %v1620 = vpop.trf.xlu0
        %v1621 = vpop.trf.xlu0
        %v1622 = vpop.trf.xlu0
        %v1623 = vpop.trf.xlu0
        %v1624 = vpop.trf.xlu0
        %v1625 = vpop.trf.xlu0
        %v1626 = vpop.trf.xlu0
        %v1627 = vpop.trf.xlu0
        %v1628 = vpop.trf.xlu0
        %v1629 = vpop.trf.xlu0
        %v1646 = vcombine.low %v1134, %v1166
        %v1647 = vcombine.low %v1198, %v1230
        %v1648 = vcombine.low %v1262, %v1294
        %v1649 = vcombine.low %v1326, %v1358
        %v1650 = vcombine.low %v1390, %v1422
        %v1651 = vcombine.low %v1454, %v1486
        %v1652 = vcombine.low %v1518, %v1550
        %v1653 = vcombine.low %v1582, %v1614
        %1662 = vxpose.xlu0.b32.start [1/16] %v1646, 128
        %1663 = vxpose.xlu0.b32.cont [2/16] %v1647, 128
        %1664 = vxpose.xlu0.b32.cont [3/16] %v1648, 128
        %1665 = vxpose.xlu0.b32.cont [4/16] %v1649, 128
        %1666 = vxpose.xlu0.b32.cont [5/16] %v1650, 128
        %1667 = vxpose.xlu0.b32.cont [6/16] %v1651, 128
        %1668 = vxpose.xlu0.b32.cont [7/16] %v1652, 128
        %1669 = vxpose.xlu0.b32.cont [8/16] %v1653, 128
        %1670 = vxpose.xlu0.b32.cont [9/16] 0.0, 128
        %1671 = vxpose.xlu0.b32.cont [10/16] 0.0, 128
        %1672 = vxpose.xlu0.b32.cont [11/16] 0.0, 128
        %1673 = vxpose.xlu0.b32.cont [12/16] 0.0, 128
        %1674 = vxpose.xlu0.b32.cont [13/16] 0.0, 128
        %1675 = vxpose.xlu0.b32.cont [14/16] 0.0, 128
        %1676 = vxpose.xlu0.b32.cont [15/16] 0.0, 128
        %1677 = vxpose.xlu0.b32.end [16/16] 0.0, 128
        %v1678 = vpop.trf.xlu0
        %v1679 = vpop.trf.xlu0
        %v1680 = vpop.trf.xlu0
        %v1681 = vpop.trf.xlu0
        %v1682 = vpop.trf.xlu0
        %v1683 = vpop.trf.xlu0
        %v1684 = vpop.trf.xlu0
        %v1685 = vpop.trf.xlu0
        %v1686 = vpop.trf.xlu0
        %v1687 = vpop.trf.xlu0
        %v1688 = vpop.trf.xlu0
        %v1689 = vpop.trf.xlu0
        %v1690 = vpop.trf.xlu0
        %v1691 = vpop.trf.xlu0
        %v1692 = vpop.trf.xlu0
        %v1693 = vpop.trf.xlu0
        %1694 = vst.msk [vmem:[%s177 + $0x4] sm:$0xf] %vm935, %v1678
        %s1695 = sand.u32 %s68, 1
        %s1696 = scalar_lea.sflag [#allocation4], %s1695
        %s1697 = sand.u32 %s68, 1
        %s1698 = smul.addr %s1697, 8
        %s1699 = scalar_lea.vmem [#allocation5], %s1698
        // Predicated region
        $region29: #{tpu_custom_call.1} parent=23 // pred_check
          %p1700 = pneg %p78
        $region30: #{tpu_custom_call.1} parent=23 // pred_check_branch
          %1702 = sbr.rel (%p1700) target = $region32
        $region31: #{tpu_custom_call.1} parent=23 // pred_region
          %s1704 = ssub.s32 128, 128
          %1705 = vsyncadd %s1696, %s1704
          %s1706 = smul.addr %s22, 2
          %s1707 = sadd.s32 %s23, %s1706
          %s1708 = smul.addr %s1707, 128
          %s1709 = scalar_lea.hbm %s1, %s1708
          %s1711 = sshll.u32 %s1699, 4
          %s1712 = int_to_ptr.vmem [resolvable:$true] %s1711
          %1714 = dma.vmem_to_hbm [thread:$0]  %s1712, 128, %s1709, %s1696
        $region32: #{tpu_custom_call.1} parent=23 // pred_fallthru
          _
      $region24: #{tpu_custom_call.1} parent=5 // pred_fallthru
        _
      %p1715 = scmp.le.s32.totalorder 2, %s13
      // Predicated region
      $region33: #{tpu_custom_call.1} parent=5 // pred_check
        %p1716 = pneg %p1715
      $region34: #{tpu_custom_call.1} parent=5 // pred_check_branch
        %1718 = sbr.rel (%p1716) target = $region36
      $region35: #{tpu_custom_call.1} parent=5 // pred_region
        %s1719 = ssub.s32 %s13, 2
        // Predicated region
        $region37: #{tpu_custom_call.1} parent=35 // pred_check
          %p1720 = pneg %p84
        $region38: #{tpu_custom_call.1} parent=35 // pred_check_branch
          %1722 = sbr.rel (%p1720) target = $region40
        $region39: #{tpu_custom_call.1} parent=35 // pred_region
          %s1723 = sand.u32 %s69, 1
          %s1724 = scalar_lea.sflag [#allocation4], %s1723
          %s1725 = sand.u32 %s69, 1
          %s1726 = smul.addr %s1725, 8
          %s1727 = scalar_lea.vmem [#allocation5], %s1726
          %1728 = dma.done %s1724, 128
        $region40: #{tpu_custom_call.1} parent=35 // pred_fallthru
          _
      $region36: #{tpu_custom_call.1} parent=5 // pred_fallthru
        _
    $region6: #{tpu_custom_call.1} parent=1 // loop_footer
      %s17 = sadd.s32 1, %s13
    $region7: #{tpu_custom_call.1} parent=1 // loop_footer_branch
      %12 = sbr.rel target = $region3
    $region8: #{tpu_custom_call.1} parent=1 // loop_exit
      _
    %1729 = vsyncpa [#allocation3], 1
    %s1730 = scalar_lea.sflag [#allocation3], 1
    %1731 = vsyncpa %s1730, 1
    %1732 = vsyncpa [#allocation4], 1
    %s1733 = scalar_lea.sflag [#allocation4], 1
    %1734 = vsyncpa %s1733, 1

</llo_original>
